<compile_context>
chip_gen: v7x
topology: tpu7x:2x2x1
jax: 0.10.0
libtpu: 0.0.40
codegen_flags: <defaults>
</compile_context>

<pallas_src>
import functools
import math

import jax
import jax.numpy as jnp
from jax.experimental import pallas as pl
from jax.experimental.pallas import tpu as pltpu

NEG = -1e30          # max-pool "padding" value (ELU output >= -1, so this acts as -inf)
EPS = 1e-5           # BatchNorm eps (PyTorch default)
VMEM_LIMIT = 32 * 1024 * 1024     # explicit scoped-VMEM request (fits v5e/v6e/v7x)
TILE_BUDGET = 16 * 1024 * 1024    # rough per-tile live-bytes budget used to cap rows


def _round_up(n, m):
    return (n + m - 1) // m * m


def _conv_tile(x_ref, w_ref, *, L):
    """Conv1d(k=3, circular pad=1) for one (R, Cp) tile; R % L == 0.

    Three K=Cp MXU matmuls on the unshifted input; the circular taps are realised by
    rolling the f32 partial products (positive shifts only) with a per-segment wrap fix.
    """
    x = x_ref[...]                                                    # (R, Cp)
    R = x.shape[0]
    # Partial products (f32 accumulation on the MXU).
    p = jnp.dot(x, w_ref[0], preferred_element_type=jnp.float32)     # tap * x[l-1]
    y = jnp.dot(x, w_ref[1], preferred_element_type=jnp.float32)     # tap * x[l]
    q = jnp.dot(x, w_ref[2], preferred_element_type=jnp.float32)     # tap * x[l+1]

    pos = jax.lax.broadcasted_iota(jnp.int32, (R, 1), 0) % L         # pos within segment
    # y[l] += p[l-1]  (circular within each length-L segment)
    p = jnp.where(pos == 0,
                  pltpu.roll(p, R - (L - 1), axis=0),                # wrap: p[l + L - 1]
                  pltpu.roll(p, 1, axis=0))                          # p[l - 1]
    # y[l] += q[l+1]
    q = jnp.where(pos == L - 1,
                  pltpu.roll(q, L - 1, axis=0),                      # wrap: q[l - (L-1)]
                  pltpu.roll(q, R - 1, axis=0))                      # q[l + 1]
    return y + p + q


def _stats_kernel(x_ref, w_ref, sum_ref, sq_ref, *, L):
    """Pass 1: accumulate per-channel sum / sum-of-squares of the conv output.

    Row padding is a whole number of all-zero segments and there is no on-chip bias,
    so padded rows contribute exactly zero -> no validity mask needed.
    """
    @pl.when(pl.program_id(1) == 0)
    def _init():
        sum_ref[...] = jnp.zeros_like(sum_ref)
        sq_ref[...] = jnp.zeros_like(sq_ref)

    y = _conv_tile(x_ref, w_ref, L=L)
    sum_ref[0:1, :] += jnp.sum(y, axis=0, keepdims=True)
    sq_ref[0:1, :] += jnp.sum(y * y, axis=0, keepdims=True)


def _apply_kernel(x_ref, w_ref, aff_ref, out_ref, y_ref, *, L):
    """Pass 2: conv -> BatchNorm (pre-folded affine) -> ELU -> MaxPool1d(3, 2, 1)."""
    y = _conv_tile(x_ref, w_ref, L=L)

    # BatchNorm, pre-folded: y*a + c with a = gamma*rsqrt(var+eps), c = beta - mean*a.
    y = y * aff_ref[0:1, :] + aff_ref[1:2, :]

    # ELU(alpha=1).
    y = jnp.where(y > 0, y, jnp.exp(jnp.minimum(y, 0.0)) - 1.0)

    # Stash once, then decimate FIRST via sublane-strided reads, pooling on half rows:
    #   out[j] = max(y[2j-1] (NEG at segment start), y[2j], y[2j+1])
    y_ref[...] = y
    half = out_ref.shape[0]
    even = y_ref[pl.ds(0, half, stride=2), :]                         # y[2j]
    odd = y_ref[pl.ds(1, half, stride=2), :]                          # y[2j+1]
    Lh = L // 2
    pos_h = jax.lax.broadcasted_iota(jnp.int32, (half, 1), 0) % Lh
    prev_odd = jnp.where(pos_h == 0, NEG, pltpu.roll(odd, 1, axis=0)) # y[2j-1]
    out_ref[...] = jnp.maximum(jnp.maximum(prev_odd, even), odd)


@functools.partial(jax.jit, static_argnames=("target_rows", "conv_dtype"))
def conv_layer_forward(x, w, b, gamma, beta, *, target_rows=1024,
                       conv_dtype=jnp.bfloat16):
    """x: (B, C, L) f32 (PyTorch NCL).  w: (C, C, 3), b/gamma/beta: (C,).

    Returns (B, C, L_out), L_out = floor((L-1)/2)+1, matching
    MaxPool1d(3,2,1)(ELU(BatchNorm1d(Conv1d(C,C,3,padding=1,circular)(x)))) with
    training-mode (biased) batch statistics.
    """
    B, C, L = x.shape
    if L % 2:
        # TODO(synk): odd-L stride-2 decimation needs a per-segment gather path.
        raise NotImplementedError("conv_layer_forward currently requires even L")
    L_out = (L - 1) // 2 + 1                      # == L // 2 for even L
    BL = B * L

    # ---- padded, length-major layout -------------------------------------------------
    Cp = _round_up(C, 128)                        # lane-dense channel axis
    base = L * 16 // math.gcd(L, 16)              # row tile: whole segments & multiple of 16
    # Cap the row tile by a VMEM budget (x bf16 + out f32 double-buffered, f32 scratch,
    # f32 temporaries ~ 28 bytes/row/lane), then by target_rows.
    rows_by_vmem = max(base, TILE_BUDGET // (28 * Cp) // base * base)
    cap_rows = min(target_rows, rows_by_vmem)
    reps = max(1, min(max(1, cap_rows // base), -(-BL // base)))
    row_tile = base * reps
    nt2 = -(-BL // row_tile)                      # pass-2 tiles
    nt1 = -(-nt2 // 2)                            # pass-1 tiles per accumulator row
    T_pad = 2 * nt1 * row_tile                    # covers both passes (>= nt2 * row_tile)

    x2 = jnp.transpose(x, (0, 2, 1)).reshape(BL, C)                    # (B*L, C)
    x2 = jnp.pad(x2, ((0, T_pad - BL), (0, Cp - C))).astype(conv_dtype)

    # weight -> (3, Cp, Cp): wt[k][c_in, c_out] = w[c_out, c_in, k]
    wt = jnp.transpose(w, (2, 1, 0))
    wt = jnp.pad(wt, ((0, 0), (0, Cp - C), (0, Cp - C))).astype(conv_dtype)

    # The conv bias is analytically cancelled by training-mode BatchNorm's mean
    # subtraction, so it never needs to go on-chip.
    del b

    w_spec = pl.BlockSpec((3, Cp, Cp), lambda *_: (0, 0, 0))

    # ---- pass 1: per-channel sum / sum-of-squares of the conv output ------------------
    # Two accumulator rows (one per "parallel" index) -> v7x's two TensorCores each
    # reduce half the tiles; on v5e/v6e it is just a serial loop.  Partial sums live in
    # row 0 of each (8, Cp) block (8-row blocks keep the sublane tiling constraint).
    acc_spec = pl.BlockSpec((8, Cp), lambda c, t: (c, 0))
    csum, csq = pl.pallas_call(
        functools.partial(_stats_kernel, L=L),
        grid=(2, nt1),
        in_specs=[pl.BlockSpec((row_tile, Cp), lambda c, t: (c * nt1 + t, 0)),
                  w_spec],
        out_specs=[acc_spec, acc_spec],
        out_shape=[jax.ShapeDtypeStruct((16, Cp), jnp.float32),
                   jax.ShapeDtypeStruct((16, Cp), jnp.float32)],
        compiler_params=pltpu.CompilerParams(
            dimension_semantics=("parallel", "arbitrary"),
            vmem_limit_bytes=VMEM_LIMIT),
    )(x2, wt)

    # ---- tiny O(C) finalize in the wrapper --------------------------------------------
    n = jnp.float32(BL)
    csum = jnp.sum(csum, axis=0)                  # only row 0 of each block is non-zero
    csq = jnp.sum(csq, axis=0)
    mean = csum[:C] / n
    var = jnp.maximum(csq[:C] / n - mean * mean, 0.0)      # biased (training-mode) var
    a = gamma.astype(jnp.float32) * jax.lax.rsqrt(var + EPS)
    c = beta.astype(jnp.float32) - mean * a
    affine = jnp.stack([jnp.pad(a, (0, Cp - C)), jnp.pad(c, (0, Cp - C))], axis=0)

    # ---- pass 2: conv + BN + ELU + maxpool, row-tile parallel (megacore) ---------------
    out2 = pl.pallas_call(
        functools.partial(_apply_kernel, L=L),
        grid=(nt2,),
        in_specs=[pl.BlockSpec((row_tile, Cp), lambda t: (t, 0)),
                  w_spec,
                  pl.BlockSpec((2, Cp), lambda t: (0, 0))],
        out_specs=pl.BlockSpec((row_tile // 2, Cp), lambda t: (t, 0)),
        out_shape=jax.ShapeDtypeStruct((nt2 * row_tile // 2, Cp), jnp.float32),
        scratch_shapes=[pltpu.VMEM((row_tile, Cp), jnp.float32)],
        compiler_params=pltpu.CompilerParams(
            dimension_semantics=("parallel",),
            vmem_limit_bytes=VMEM_LIMIT),
    )(x2, wt, affine)

    out = out2[:B * L_out, :C]                                 # drop row / channel padding
    return jnp.transpose(out.reshape(B, L_out, C), (0, 2, 1))  # (B, C, L_out)


def ref_forward(x, w, b, gamma, beta, conv_dtype=jnp.float32):
    """Pure-JAX reference of the PyTorch forward (training-mode BatchNorm).

    conv_dtype lets the reference use the same quantized conv inputs as the kernel.
    """
    B, C, L = x.shape
    hi = jax.lax.Precision.HIGHEST
    xq = x.astype(conv_dtype).astype(jnp.float32)
    wq = w.astype(conv_dtype).astype(jnp.float32)
    xm1 = jnp.roll(xq, 1, axis=-1)
    xp1 = jnp.roll(xq, -1, axis=-1)
    y = (jnp.einsum('oi,bil->bol', wq[:, :, 0], xm1, precision=hi)
         + jnp.einsum('oi,bil->bol', wq[:, :, 1], xq, precision=hi)
         + jnp.einsum('oi,bil->bol', wq[:, :, 2], xp1, precision=hi)) + b[None, :, None]
    mean = y.mean(axis=(0, 2), keepdims=True)
    var = ((y - mean) ** 2).mean(axis=(0, 2), keepdims=True)
    y = (y - mean) / jnp.sqrt(var + EPS) * gamma[None, :, None] + beta[None, :, None]
    y = jnp.where(y > 0, y, jnp.exp(y) - 1.0)
    ypad = jnp.pad(y, ((0, 0), (0, 0), (1, 1)), constant_values=NEG)
    L_out = (L - 1) // 2 + 1
    outs = [jnp.max(ypad[:, :, 2 * j:2 * j + 3], axis=-1) for j in range(L_out)]
    return jnp.stack(outs, axis=-1)


if __name__ == "__main__":
    B, C, L = 2, 4, 16
    key = jax.random.PRNGKey(0)
    kx, kw, kb = jax.random.split(key, 3)

    x = jax.random.normal(kx, (B, C, L), dtype=jnp.float32)

    # Deterministic synthetic parameters (Conv1d(c_in, c_in, 3) default-init shapes).
    fan_in = C * 3
    bound = 1.0 / math.sqrt(fan_in)
    w = jax.random.uniform(kw, (C, C, 3), jnp.float32, -bound, bound)   # (out, in, k)
    b = jax.random.uniform(kb, (C,), jnp.float32, -bound, bound)
    gamma = jnp.ones((C,), jnp.float32)      # BatchNorm default affine init
    beta = jnp.zeros((C,), jnp.float32)
    # TODO(synk): BatchNorm running-stat (momentum) updates are module state, not forward output.

    out = jax.block_until_ready(conv_layer_forward(x, w, b, gamma, beta))

    # Tight check vs a reference using the same bf16-quantized conv inputs (isolates
    # kernel correctness from the deliberate bf16 matmul-input cast) ...
    ref_q = jax.block_until_ready(ref_forward(x, w, b, gamma, beta, conv_dtype=jnp.bfloat16))
    # ... plus a loose sanity bound against the exact f32 reference.
    ref_f = jax.block_until_ready(ref_forward(x, w, b, gamma, beta, conv_dtype=jnp.float32))

    assert out.shape == (B, C, (L - 1) // 2 + 1), out.shape
    err_q = float(jnp.max(jnp.abs(out - ref_q)))
    err_f = float(jnp.max(jnp.abs(out - ref_f)))
    assert jnp.allclose(out, ref_q, rtol=1e-2, atol=1e-2), f"max abs diff vs quantized ref {err_q}"
    assert jnp.allclose(out, ref_f, rtol=1e-1, atol=1e-1), f"max abs diff vs f32 ref {err_f}"
    print("KERNEL_OK")
</pallas_src>

<mosaic_0001>
module attributes {stable_mosaic.version = 11 : i64} {
  func.func @_stats_kernel(%arg0: i32, %arg1: i32, %arg2: memref<32x128xbf16, #tpu.memory_space<vmem>>, %arg3: memref<3x128x128xbf16, #tpu.memory_space<vmem>>, %arg4: memref<8x128xf32, #tpu.memory_space<vmem>>, %arg5: memref<8x128xf32, #tpu.memory_space<vmem>>) attributes {dimension_semantics = [#tpu.dimension_semantics<parallel>, #tpu.dimension_semantics<arbitrary>], iteration_bounds = array<i64: 2, 1>, scalar_prefetch = 0 : i64, scratch_operands = 0 : i64, tpu.core_type = #tpu.core_type<tc>, window_params = [{transform_indices = @transform_0, window_bounds = array<i64: 32, 128>}, {pipeline_mode = #tpu.pipeline_mode<synchronous>, transform_indices = @transform_1, window_bounds = array<i64: 3, 128, 128>}, {transform_indices = @transform_2, window_bounds = array<i64: 8, 128>}, {transform_indices = @transform_3, window_bounds = array<i64: 8, 128>}]} {
    %c0_i32 = arith.constant 0 : i32
    %0 = arith.cmpi eq, %arg1, %c0_i32 : i32
    %1 = arith.extui %0 : i1 to i32
    %c0_i32_0 = arith.constant 0 : i32
    %2 = arith.cmpi ne, %1, %c0_i32_0 : i32
    scf.if %2 {
      %cst_28 = arith.constant 0.000000e+00 : f32
      %57 = vector.broadcast %cst_28 : f32 to vector<8x128xf32>
      %c0_29 = arith.constant 0 : index
      %c0_30 = arith.constant 0 : index
      %58 = vector.load %arg4[%c0_29, %c0_30] : memref<8x128xf32, #tpu.memory_space<vmem>>, vector<8x128xf32>
      tpu.vector_store %arg4[%c0_29, %c0_30], %57 {strides = array<i32>} : memref<8x128xf32, #tpu.memory_space<vmem>>, vector<8x128xf32>,
      %cst_31 = arith.constant 0.000000e+00 : f32
      %59 = vector.broadcast %cst_31 : f32 to vector<8x128xf32>
      %c0_32 = arith.constant 0 : index
      %c0_33 = arith.constant 0 : index
      %60 = vector.load %arg5[%c0_32, %c0_33] : memref<8x128xf32, #tpu.memory_space<vmem>>, vector<8x128xf32>
      tpu.vector_store %arg5[%c0_32, %c0_33], %59 {strides = array<i32>} : memref<8x128xf32, #tpu.memory_space<vmem>>, vector<8x128xf32>,
    } else {
    }
    %c0 = arith.constant 0 : index
    %c0_1 = arith.constant 0 : index
    %3 = vector.load %arg2[%c0, %c0_1] : memref<32x128xbf16, #tpu.memory_space<vmem>>, vector<32x128xbf16>
    %c0_2 = arith.constant 0 : index
    %c0_3 = arith.constant 0 : index
    %c0_4 = arith.constant 0 : index
    %4 = vector.load %arg3[%c0_2, %c0_3, %c0_4] : memref<3x128x128xbf16, #tpu.memory_space<vmem>>, vector<1x128x128xbf16>
    %5 = vector.shape_cast %4 : vector<1x128x128xbf16> to vector<128x128xbf16>
    %cst = arith.constant dense<0.000000e+00> : vector<32x128xf32>
    %6 = tpu.matmul %3, %5, %cst {dimension_numbers = #tpu.dot_dimension_numbers<[1], [0], [0], [1], [0, 0, 1, 1], [], []>} : vector<32x128xbf16>, vector<128x128xbf16>, vector<32x128xf32> -> vector<32x128xf32>
    %c1 = arith.constant 1 : index
    %c0_5 = arith.constant 0 : index
    %c0_6 = arith.constant 0 : index
    %7 = vector.load %arg3[%c1, %c0_5, %c0_6] : memref<3x128x128xbf16, #tpu.memory_space<vmem>>, vector<1x128x128xbf16>
    %8 = vector.shape_cast %7 : vector<1x128x128xbf16> to vector<128x128xbf16>
    %cst_7 = arith.constant dense<0.000000e+00> : vector<32x128xf32>
    %9 = tpu.matmul %3, %8, %cst_7 {dimension_numbers = #tpu.dot_dimension_numbers<[1], [0], [0], [1], [0, 0, 1, 1], [], []>} : vector<32x128xbf16>, vector<128x128xbf16>, vector<32x128xf32> -> vector<32x128xf32>
    %c2 = arith.constant 2 : index
    %c0_8 = arith.constant 0 : index
    %c0_9 = arith.constant 0 : index
    %10 = vector.load %arg3[%c2, %c0_8, %c0_9] : memref<3x128x128xbf16, #tpu.memory_space<vmem>>, vector<1x128x128xbf16>
    %11 = vector.shape_cast %10 : vector<1x128x128xbf16> to vector<128x128xbf16>
    %cst_10 = arith.constant dense<0.000000e+00> : vector<32x128xf32>
    %12 = tpu.matmul %3, %11, %cst_10 {dimension_numbers = #tpu.dot_dimension_numbers<[1], [0], [0], [1], [0, 0, 1, 1], [], []>} : vector<32x128xbf16>, vector<128x128xbf16>, vector<32x128xf32> -> vector<32x128xf32>
    %13 = tpu.iota {dimensions = array<i32: 0>} : vector<32x1xi32>
    %c16_i32 = arith.constant 16 : i32
    %c0_i32_11 = arith.constant 0 : i32
    %14 = arith.cmpi eq, %c16_i32, %c0_i32_11 : i32
    %c1_i32 = arith.constant 1 : i32
    %15 = arith.select %14, %c1_i32, %c16_i32 : i32
    %16 = vector.broadcast %15 : i32 to vector<32x1xi32>
    %17 = arith.remsi %13, %16 : vector<32x1xi32>
    %c0_i32_12 = arith.constant 0 : i32
    %18 = vector.broadcast %c0_i32_12 : i32 to vector<32x1xi32>
    %19 = arith.cmpi ne, %17, %18 : vector<32x1xi32>
    %c0_i32_13 = arith.constant 0 : i32
    %20 = vector.broadcast %c0_i32_13 : i32 to vector<32x1xi32>
    %21 = arith.cmpi slt, %17, %20 : vector<32x1xi32>
    %c0_i32_14 = arith.constant 0 : i32
    %22 = arith.cmpi slt, %15, %c0_i32_14 : i32
    %23 = vector.broadcast %22 : i1 to vector<32x1xi1>
    %24 = vector.broadcast %23 : vector<32x1xi1> to vector<32x1xi1>
    %25 = arith.xori %21, %24 : vector<32x1xi1>
    %26 = arith.andi %25, %19 : vector<32x1xi1>
    %27 = vector.broadcast %15 : i32 to vector<32x1xi32>
    %28 = arith.addi %17, %27 : vector<32x1xi32>
    %29 = arith.select %26, %28, %17 : vector<32x1xi1>, vector<32x1xi32>
    %c0_i32_15 = arith.constant 0 : i32
    %30 = vector.broadcast %c0_i32_15 : i32 to vector<32x1xi32>
    %31 = arith.cmpi eq, %29, %30 : vector<32x1xi32>
    %c17_i32 = arith.constant 17 : i32
    %32 = tpu.dynamic_rotate %6 by %c17_i32 dim 0 : vector<32x128xf32>, i32 -> vector<32x128xf32>
    %c1_i32_16 = arith.constant 1 : i32
    %33 = tpu.dynamic_rotate %6 by %c1_i32_16 dim 0 : vector<32x128xf32>, i32 -> vector<32x128xf32>
    %34 = vector.shape_cast %31 : vector<32x1xi1> to vector<32x1xi1>
    %35 = vector.broadcast %34 : vector<32x1xi1> to vector<32x128xi1>
    %36 = arith.select %35, %32, %33 : vector<32x128xi1>, vector<32x128xf32>
    %c15_i32 = arith.constant 15 : i32
    %37 = vector.broadcast %c15_i32 : i32 to vector<32x1xi32>
    %38 = arith.cmpi eq, %29, %37 : vector<32x1xi32>
    %c15_i32_17 = arith.constant 15 : i32
    %39 = tpu.dynamic_rotate %12 by %c15_i32_17 dim 0 : vector<32x128xf32>, i32 -> vector<32x128xf32>
    %c31_i32 = arith.constant 31 : i32
    %40 = tpu.dynamic_rotate %12 by %c31_i32 dim 0 : vector<32x128xf32>, i32 -> vector<32x128xf32>
    %41 = vector.shape_cast %38 : vector<32x1xi1> to vector<32x1xi1>
    %42 = vector.broadcast %41 : vector<32x1xi1> to vector<32x128xi1>
    %43 = arith.select %42, %39, %40 : vector<32x128xi1>, vector<32x128xf32>
    %44 = arith.addf %9, %36 : vector<32x128xf32>
    %45 = arith.addf %44, %43 : vector<32x128xf32>
    %c0_18 = arith.constant 0 : index
    %c0_19 = arith.constant 0 : index
    %46 = vector.load %arg4[%c0_18, %c0_19] : memref<8x128xf32, #tpu.memory_space<vmem>>, vector<1x128xf32>
    %cst_20 = arith.constant dense<0.000000e+00> : vector<128xf32>
    %47 = vector.multi_reduction <add>, %45, %cst_20 [0] : vector<32x128xf32> to vector<128xf32>
    %48 = vector.shape_cast %47 : vector<128xf32> to vector<1x128xf32>
    %49 = arith.addf %46, %48 : vector<1x128xf32>
    %c0_21 = arith.constant 0 : index
    %c0_22 = arith.constant 0 : index
    %50 = vector.load %arg4[%c0_21, %c0_22] : memref<8x128xf32, #tpu.memory_space<vmem>>, vector<1x128xf32>
    tpu.vector_store %arg4[%c0_21, %c0_22], %49 {strides = array<i32>} : memref<8x128xf32, #tpu.memory_space<vmem>>, vector<1x128xf32>,
    %c0_23 = arith.constant 0 : index
    %c0_24 = arith.constant 0 : index
    %51 = vector.load %arg5[%c0_23, %c0_24] : memref<8x128xf32, #tpu.memory_space<vmem>>, vector<1x128xf32>
    %52 = arith.mulf %45, %45 : vector<32x128xf32>
    %cst_25 = arith.constant dense<0.000000e+00> : vector<128xf32>
    %53 = vector.multi_reduction <add>, %52, %cst_25 [0] : vector<32x128xf32> to vector<128xf32>
    %54 = vector.shape_cast %53 : vector<128xf32> to vector<1x128xf32>
    %55 = arith.addf %51, %54 : vector<1x128xf32>
    %c0_26 = arith.constant 0 : index
    %c0_27 = arith.constant 0 : index
    %56 = vector.load %arg5[%c0_26, %c0_27] : memref<8x128xf32, #tpu.memory_space<vmem>>, vector<1x128xf32>
    tpu.vector_store %arg5[%c0_26, %c0_27], %55 {strides = array<i32>} : memref<8x128xf32, #tpu.memory_space<vmem>>, vector<1x128xf32>,
    return
  }
  func.func @transform_0(%arg0: i32, %arg1: i32) -> (i32, i32) {
    %c1_i32 = arith.constant 1 : i32
    %0 = arith.muli %arg0, %c1_i32 : i32
    %1 = arith.addi %0, %arg1 : i32
    %c0_i32 = arith.constant 0 : i32
    %c0_i32_0 = arith.constant 0 : i32
    return %1, %c0_i32 : i32, i32
  }
  func.func @transform_1(%arg0: i32, %arg1: i32) -> (i32, i32, i32) {
    %c0_i32 = arith.constant 0 : i32
    %c0_i32_0 = arith.constant 0 : i32
    %c0_i32_1 = arith.constant 0 : i32
    %c0_i32_2 = arith.constant 0 : i32
    return %c0_i32, %c0_i32_0, %c0_i32_1 : i32, i32, i32
  }
  func.func @transform_2(%arg0: i32, %arg1: i32) -> (i32, i32) {
    %c0_i32 = arith.constant 0 : i32
    %c0_i32_0 = arith.constant 0 : i32
    return %arg0, %c0_i32 : i32, i32
  }
  func.func @transform_3(%arg0: i32, %arg1: i32) -> (i32, i32) {
    %c0_i32 = arith.constant 0 : i32
    %c0_i32_0 = arith.constant 0 : i32
    return %arg0, %c0_i32 : i32, i32
  }
}

module attributes {stable_mosaic.version = 11 : i64} {
  func.func @_apply_kernel(%arg0: i32, %arg1: memref<32x128xbf16, #tpu.memory_space<vmem>>, %arg2: memref<3x128x128xbf16, #tpu.memory_space<vmem>>, %arg3: memref<2x128xf32, #tpu.memory_space<vmem>>, %arg4: memref<16x128xf32, #tpu.memory_space<vmem>>, %arg5: memref<32x128xf32, #tpu.memory_space<vmem>>) attributes {dimension_semantics = [#tpu.dimension_semantics<parallel>], iteration_bounds = array<i64: 1>, scalar_prefetch = 0 : i64, scratch_operands = 1 : i64, tpu.core_type = #tpu.core_type<tc>, window_params = [{transform_indices = @transform_0, window_bounds = array<i64: 32, 128>}, {pipeline_mode = #tpu.pipeline_mode<synchronous>, transform_indices = @transform_1, window_bounds = array<i64: 3, 128, 128>}, {pipeline_mode = #tpu.pipeline_mode<synchronous>, transform_indices = @transform_2, window_bounds = array<i64: 2, 128>}, {transform_indices = @transform_3, window_bounds = array<i64: 16, 128>}]} {
    %c0 = arith.constant 0 : index
    %c0_0 = arith.constant 0 : index
    %0 = vector.load %arg1[%c0, %c0_0] : memref<32x128xbf16, #tpu.memory_space<vmem>>, vector<32x128xbf16>
    %c0_1 = arith.constant 0 : index
    %c0_2 = arith.constant 0 : index
    %c0_3 = arith.constant 0 : index
    %1 = vector.load %arg2[%c0_1, %c0_2, %c0_3] : memref<3x128x128xbf16, #tpu.memory_space<vmem>>, vector<1x128x128xbf16>
    %2 = vector.shape_cast %1 : vector<1x128x128xbf16> to vector<128x128xbf16>
    %cst = arith.constant dense<0.000000e+00> : vector<32x128xf32>
    %3 = tpu.matmul %0, %2, %cst {dimension_numbers = #tpu.dot_dimension_numbers<[1], [0], [0], [1], [0, 0, 1, 1], [], []>} : vector<32x128xbf16>, vector<128x128xbf16>, vector<32x128xf32> -> vector<32x128xf32>
    %c1 = arith.constant 1 : index
    %c0_4 = arith.constant 0 : index
    %c0_5 = arith.constant 0 : index
    %4 = vector.load %arg2[%c1, %c0_4, %c0_5] : memref<3x128x128xbf16, #tpu.memory_space<vmem>>, vector<1x128x128xbf16>
    %5 = vector.shape_cast %4 : vector<1x128x128xbf16> to vector<128x128xbf16>
    %cst_6 = arith.constant dense<0.000000e+00> : vector<32x128xf32>
    %6 = tpu.matmul %0, %5, %cst_6 {dimension_numbers = #tpu.dot_dimension_numbers<[1], [0], [0], [1], [0, 0, 1, 1], [], []>} : vector<32x128xbf16>, vector<128x128xbf16>, vector<32x128xf32> -> vector<32x128xf32>
    %c2 = arith.constant 2 : index
    %c0_7 = arith.constant 0 : index
    %c0_8 = arith.constant 0 : index
    %7 = vector.load %arg2[%c2, %c0_7, %c0_8] : memref<3x128x128xbf16, #tpu.memory_space<vmem>>, vector<1x128x128xbf16>
    %8 = vector.shape_cast %7 : vector<1x128x128xbf16> to vector<128x128xbf16>
    %cst_9 = arith.constant dense<0.000000e+00> : vector<32x128xf32>
    %9 = tpu.matmul %0, %8, %cst_9 {dimension_numbers = #tpu.dot_dimension_numbers<[1], [0], [0], [1], [0, 0, 1, 1], [], []>} : vector<32x128xbf16>, vector<128x128xbf16>, vector<32x128xf32> -> vector<32x128xf32>
    %10 = tpu.iota {dimensions = array<i32: 0>} : vector<32x1xi32>
    %c16_i32 = arith.constant 16 : i32
    %c0_i32 = arith.constant 0 : i32
    %11 = arith.cmpi eq, %c16_i32, %c0_i32 : i32
    %c1_i32 = arith.constant 1 : i32
    %12 = arith.select %11, %c1_i32, %c16_i32 : i32
    %13 = vector.broadcast %12 : i32 to vector<32x1xi32>
    %14 = arith.remsi %10, %13 : vector<32x1xi32>
    %c0_i32_10 = arith.constant 0 : i32
    %15 = vector.broadcast %c0_i32_10 : i32 to vector<32x1xi32>
    %16 = arith.cmpi ne, %14, %15 : vector<32x1xi32>
    %c0_i32_11 = arith.constant 0 : i32
    %17 = vector.broadcast %c0_i32_11 : i32 to vector<32x1xi32>
    %18 = arith.cmpi slt, %14, %17 : vector<32x1xi32>
    %c0_i32_12 = arith.constant 0 : i32
    %19 = arith.cmpi slt, %12, %c0_i32_12 : i32
    %20 = vector.broadcast %19 : i1 to vector<32x1xi1>
    %21 = vector.broadcast %20 : vector<32x1xi1> to vector<32x1xi1>
    %22 = arith.xori %18, %21 : vector<32x1xi1>
    %23 = arith.andi %22, %16 : vector<32x1xi1>
    %24 = vector.broadcast %12 : i32 to vector<32x1xi32>
    %25 = arith.addi %14, %24 : vector<32x1xi32>
    %26 = arith.select %23, %25, %14 : vector<32x1xi1>, vector<32x1xi32>
    %c0_i32_13 = arith.constant 0 : i32
    %27 = vector.broadcast %c0_i32_13 : i32 to vector<32x1xi32>
    %28 = arith.cmpi eq, %26, %27 : vector<32x1xi32>
    %c17_i32 = arith.constant 17 : i32
    %29 = tpu.dynamic_rotate %3 by %c17_i32 dim 0 : vector<32x128xf32>, i32 -> vector<32x128xf32>
    %c1_i32_14 = arith.constant 1 : i32
    %30 = tpu.dynamic_rotate %3 by %c1_i32_14 dim 0 : vector<32x128xf32>, i32 -> vector<32x128xf32>
    %31 = vector.shape_cast %28 : vector<32x1xi1> to vector<32x1xi1>
    %32 = vector.broadcast %31 : vector<32x1xi1> to vector<32x128xi1>
    %33 = arith.select %32, %29, %30 : vector<32x128xi1>, vector<32x128xf32>
    %c15_i32 = arith.constant 15 : i32
    %34 = vector.broadcast %c15_i32 : i32 to vector<32x1xi32>
    %35 = arith.cmpi eq, %26, %34 : vector<32x1xi32>
    %c15_i32_15 = arith.constant 15 : i32
    %36 = tpu.dynamic_rotate %9 by %c15_i32_15 dim 0 : vector<32x128xf32>, i32 -> vector<32x128xf32>
    %c31_i32 = arith.constant 31 : i32
    %37 = tpu.dynamic_rotate %9 by %c31_i32 dim 0 : vector<32x128xf32>, i32 -> vector<32x128xf32>
    %38 = vector.shape_cast %35 : vector<32x1xi1> to vector<32x1xi1>
    %39 = vector.broadcast %38 : vector<32x1xi1> to vector<32x128xi1>
    %40 = arith.select %39, %36, %37 : vector<32x128xi1>, vector<32x128xf32>
    %41 = arith.addf %6, %33 : vector<32x128xf32>
    %42 = arith.addf %41, %40 : vector<32x128xf32>
    %c0_16 = arith.constant 0 : index
    %c0_17 = arith.constant 0 : index
    %43 = vector.load %arg3[%c0_16, %c0_17] : memref<2x128xf32, #tpu.memory_space<vmem>>, vector<1x128xf32>
    %44 = vector.broadcast %43 : vector<1x128xf32> to vector<32x128xf32>
    %45 = arith.mulf %42, %44 : vector<32x128xf32>
    %c1_18 = arith.constant 1 : index
    %c0_19 = arith.constant 0 : index
    %46 = vector.load %arg3[%c1_18, %c0_19] : memref<2x128xf32, #tpu.memory_space<vmem>>, vector<1x128xf32>
    %47 = vector.broadcast %46 : vector<1x128xf32> to vector<32x128xf32>
    %48 = arith.addf %45, %47 : vector<32x128xf32>
    %cst_20 = arith.constant 0.000000e+00 : f32
    %49 = vector.broadcast %cst_20 : f32 to vector<32x128xf32>
    %50 = arith.cmpf ogt, %48, %49 : vector<32x128xf32>
    %cst_21 = arith.constant 0.000000e+00 : f32
    %51 = vector.broadcast %cst_21 : f32 to vector<32x128xf32>
    %52 = arith.minimumf %48, %51 : vector<32x128xf32>
    %53 = math.exp %52 : vector<32x128xf32>
    %cst_22 = arith.constant 1.000000e+00 : f32
    %54 = vector.broadcast %cst_22 : f32 to vector<32x128xf32>
    %55 = arith.subf %53, %54 : vector<32x128xf32>
    %56 = arith.select %50, %48, %55 : vector<32x128xi1>, vector<32x128xf32>
    %c0_23 = arith.constant 0 : index
    %c0_24 = arith.constant 0 : index
    %57 = vector.load %arg5[%c0_23, %c0_24] : memref<32x128xf32, #tpu.memory_space<vmem>>, vector<32x128xf32>
    tpu.vector_store %arg5[%c0_23, %c0_24], %56 {strides = array<i32>} : memref<32x128xf32, #tpu.memory_space<vmem>>, vector<32x128xf32>,
    %c0_25 = arith.constant 0 : index
    %c0_26 = arith.constant 0 : index
    %58 = tpu.strided_load %arg5[%c0_25, %c0_26] {strides = array<i32: 2, 1>} : memref<32x128xf32, #tpu.memory_space<vmem>>, vector<16x128xf32>
    %c1_27 = arith.constant 1 : index
    %c0_28 = arith.constant 0 : index
    %59 = tpu.strided_load %arg5[%c1_27, %c0_28] {strides = array<i32: 2, 1>} : memref<32x128xf32, #tpu.memory_space<vmem>>, vector<16x128xf32>
    %60 = tpu.iota {dimensions = array<i32: 0>} : vector<16x1xi32>
    %c8_i32 = arith.constant 8 : i32
    %c0_i32_29 = arith.constant 0 : i32
    %61 = arith.cmpi eq, %c8_i32, %c0_i32_29 : i32
    %c1_i32_30 = arith.constant 1 : i32
    %62 = arith.select %61, %c1_i32_30, %c8_i32 : i32
    %63 = vector.broadcast %62 : i32 to vector<16x1xi32>
    %64 = arith.remsi %60, %63 : vector<16x1xi32>
    %c0_i32_31 = arith.constant 0 : i32
    %65 = vector.broadcast %c0_i32_31 : i32 to vector<16x1xi32>
    %66 = arith.cmpi ne, %64, %65 : vector<16x1xi32>
    %c0_i32_32 = arith.constant 0 : i32
    %67 = vector.broadcast %c0_i32_32 : i32 to vector<16x1xi32>
    %68 = arith.cmpi slt, %64, %67 : vector<16x1xi32>
    %c0_i32_33 = arith.constant 0 : i32
    %69 = arith.cmpi slt, %62, %c0_i32_33 : i32
    %70 = vector.broadcast %69 : i1 to vector<16x1xi1>
    %71 = vector.broadcast %70 : vector<16x1xi1> to vector<16x1xi1>
    %72 = arith.xori %68, %71 : vector<16x1xi1>
    %73 = arith.andi %72, %66 : vector<16x1xi1>
    %74 = vector.broadcast %62 : i32 to vector<16x1xi32>
    %75 = arith.addi %64, %74 : vector<16x1xi32>
    %76 = arith.select %73, %75, %64 : vector<16x1xi1>, vector<16x1xi32>
    %c0_i32_34 = arith.constant 0 : i32
    %77 = vector.broadcast %c0_i32_34 : i32 to vector<16x1xi32>
    %78 = arith.cmpi eq, %76, %77 : vector<16x1xi32>
    %c1_i32_35 = arith.constant 1 : i32
    %79 = tpu.dynamic_rotate %59 by %c1_i32_35 dim 0 : vector<16x128xf32>, i32 -> vector<16x128xf32>
    %cst_36 = arith.constant -1.000000e+30 : f32
    %80 = vector.shape_cast %78 : vector<16x1xi1> to vector<16x1xi1>
    %81 = vector.broadcast %80 : vector<16x1xi1> to vector<16x128xi1>
    %82 = vector.broadcast %cst_36 : f32 to vector<16x128xf32>
    %83 = arith.select %81, %82, %79 : vector<16x128xi1>, vector<16x128xf32>
    %84 = arith.maximumf %83, %58 : vector<16x128xf32>
    %85 = arith.maximumf %84, %59 : vector<16x128xf32>
    %c0_37 = arith.constant 0 : index
    %c0_38 = arith.constant 0 : index
    %86 = vector.load %arg4[%c0_37, %c0_38] : memref<16x128xf32, #tpu.memory_space<vmem>>, vector<16x128xf32>
    tpu.vector_store %arg4[%c0_37, %c0_38], %85 {strides = array<i32>} : memref<16x128xf32, #tpu.memory_space<vmem>>, vector<16x128xf32>,
    return
  }
  func.func @transform_0(%arg0: i32) -> (i32, i32) {
    %c0_i32 = arith.constant 0 : i32
    %c0_i32_0 = arith.constant 0 : i32
    return %arg0, %c0_i32 : i32, i32
  }
  func.func @transform_1(%arg0: i32) -> (i32, i32, i32) {
    %c0_i32 = arith.constant 0 : i32
    %c0_i32_0 = arith.constant 0 : i32
    %c0_i32_1 = arith.constant 0 : i32
    %c0_i32_2 = arith.constant 0 : i32
    return %c0_i32, %c0_i32_0, %c0_i32_1 : i32, i32, i32
  }
  func.func @transform_2(%arg0: i32) -> (i32, i32) {
    %c0_i32 = arith.constant 0 : i32
    %c0_i32_0 = arith.constant 0 : i32
    %c0_i32_1 = arith.constant 0 : i32
    return %c0_i32, %c0_i32_0 : i32, i32
  }
  func.func @transform_3(%arg0: i32) -> (i32, i32) {
    %c0_i32 = arith.constant 0 : i32
    %c0_i32_0 = arith.constant 0 : i32
    return %arg0, %c0_i32 : i32, i32
  }
}

</mosaic_0001>

<llo_original>
// kernel: conv_layer_forward.2
$region0: #{conv_layer_forward.2}
  #allocation0 [shape = 'u32[]', space=smem, size = 0x4, offset = 0x4, fixed_abs, tag = 'smem constant byte address 0x4 - core index']
  #allocation1 [shape = 'u32[144,128]{1,0:T(1,128)}', space=vmem, size = 0x12000, scoped, tag = 'internal scratch']
  %s0 = inlined_call_operand.vmem [shape: bf16[64,128], index: 0, kind: input, shape index: {}]
  %s1 = inlined_call_operand.vmem [shape: bf16[3,128,128], index: 1, kind: input, shape index: {}]
  %s2 = inlined_call_operand.vmem [shape: f32[16,128], index: 2, kind: output, shape index: {0}]
  %s3 = inlined_call_operand.vmem [shape: f32[16,128], index: 3, kind: output, shape index: {1}]
  %4 = xla_tuple %s2, %s3
  %s5 = sld [smem:[#allocation0]]
  $region53: #{conv_layer_forward.2} parent=0
    _
  %s7 = ssub.s32 1, %s5
  %s8 = scalar_select 0, %s7, %s5
  loop: start=0, step=1, limit=4
  $region2: #{conv_layer_forward.2} parent=0 // loop_pre_header
    _
  $region3: #{conv_layer_forward.2} parent=0 // loop_header
    %s10 = sphi 0, %s14
    %p11 = scmp.ge.s32.totalorder %s10, 4
    %s17 = sphi 0, %s29
    %s18 = sphi 0, %s25
    %s19 = sphi 0, %s17
    %s20 = sphi 0, %s18
    %s21 = sphi 0, %s19
    %s22 = sphi 0, %s20
    %s34 = sphi 0, %s36
    %s37 = sphi 0, %s34
    %s38 = sphi 0, %s37
    %s54 = sphi 0, %s38
    %s58 = sphi 0, %s58
    %s60 = sphi 0, %s58
    %s61 = sphi 0, %s60
    %s75 = sphi 0, %s61
    %s81 = sphi 0, %s83
    %s84 = sphi 0, %s81
    %s85 = sphi 0, %s84
    %s101 = sphi 0, %s85
    %s107 = sphi 0, %s109
    %s110 = sphi 0, %s107
    %s111 = sphi 0, %s110
    %s127 = sphi 0, %s111
  $region4: #{conv_layer_forward.2} parent=0 // loop_header_branch
    %13 = sbr.rel (%p11) target = $region8
  $region5: #{conv_layer_forward.2} parent=0 // loop_body
    %s15 = ssub.s32 %s10, 1
    %s16 = ssub.s32 %s10, 2
    %s23 = sadd.s32 1, %s18
    %p24 = scmp.ge.s32.totalorder %s23, 1
    %s25 = scalar_select %p24, 0, %s23
    %s26 = sadd.s32 1, %s17
    %s27 = scalar_select %p24, %s26, %s17
    %p28 = scmp.ge.s32.totalorder %s27, 2
    %s29 = scalar_select %p28, 0, %s27
    %s30 = sadd.s32 %s17, %s18
    %s31 = sadd.s32 %s29, %s25
    %s32 = ssub.s32 %s30, %s31
    %p33 = scmp.eq.s32.totalorder %s32, 0
    %s35 = sadd.s32 %s34, 1
    %s36 = scalar_select %p33, %s34, %s35
    %p39 = pneg %p33
    %p40 = scmp.eq.s32.totalorder %s10, 1
    %p41 = por %p39, %p40
    %p42 = scmp.ne.s32.totalorder %s34, %s37
    %p43 = scmp.eq.s32.totalorder %s10, 0
    %p44 = por %p42, %p43
    %p45 = scmp.ne.s32.totalorder %s34, %s37
    %p46 = scmp.eq.s32.totalorder %s15, 1
    %p47 = por %p45, %p46
    %p48 = scmp.ne.s32.totalorder %s37, %s38
    %p49 = scmp.eq.s32.totalorder %s15, 0
    %p50 = por %p48, %p49
    %p51 = scmp.ne.s32.totalorder %s37, %s38
    %p52 = scmp.eq.s32.totalorder %s16, 1
    %p53 = por %p51, %p52
    %p55 = scmp.ne.s32.totalorder %s38, %s54
    %p56 = scmp.eq.s32.totalorder %s16, 0
    %p57 = por %p55, %p56
    %s59 = sadd.s32 %s58, 1
    %p62 = scmp.eq.s32.totalorder %s10, 1
    %p63 = scmp.ne.s32.totalorder %s58, %s60
    %p64 = scmp.eq.s32.totalorder %s10, 0
    %p65 = por %p63, %p64
    %p66 = scmp.ne.s32.totalorder %s58, %s60
    %p67 = scmp.eq.s32.totalorder %s15, 1
    %p68 = por %p66, %p67
    %p69 = scmp.ne.s32.totalorder %s60, %s61
    %p70 = scmp.eq.s32.totalorder %s15, 0
    %p71 = por %p69, %p70
    %p72 = scmp.ne.s32.totalorder %s60, %s61
    %p73 = scmp.eq.s32.totalorder %s16, 1
    %p74 = por %p72, %p73
    %p76 = scmp.ne.s32.totalorder %s61, %s75
    %p77 = scmp.eq.s32.totalorder %s16, 0
    %p78 = por %p76, %p77
    %s79 = ssub.s32 %s17, %s29
    %p80 = scmp.eq.s32.totalorder %s79, 0
    %s82 = sadd.s32 %s81, 1
    %s83 = scalar_select %p80, %s81, %s82
    %p86 = pneg %p80
    %p87 = scmp.eq.s32.totalorder %s10, 1
    %p88 = por %p86, %p87
    %p89 = scmp.ne.s32.totalorder %s81, %s84
    %p90 = scmp.eq.s32.totalorder %s10, 0
    %p91 = por %p89, %p90
    %p92 = scmp.ne.s32.totalorder %s81, %s84
    %p93 = scmp.eq.s32.totalorder %s15, 1
    %p94 = por %p92, %p93
    %p95 = scmp.ne.s32.totalorder %s84, %s85
    %p96 = scmp.eq.s32.totalorder %s15, 0
    %p97 = por %p95, %p96
    %p98 = scmp.ne.s32.totalorder %s84, %s85
    %p99 = scmp.eq.s32.totalorder %s16, 1
    %p100 = por %p98, %p99
    %p102 = scmp.ne.s32.totalorder %s85, %s101
    %p103 = scmp.eq.s32.totalorder %s16, 0
    %p104 = por %p102, %p103
    %s105 = ssub.s32 %s17, %s29
    %p106 = scmp.eq.s32.totalorder %s105, 0
    %s108 = sadd.s32 %s107, 1
    %s109 = scalar_select %p106, %s107, %s108
    %p112 = pneg %p106
    %p113 = scmp.eq.s32.totalorder %s10, 1
    %p114 = por %p112, %p113
    %p115 = scmp.ne.s32.totalorder %s107, %s110
    %p116 = scmp.eq.s32.totalorder %s10, 0
    %p117 = por %p115, %p116
    %p118 = scmp.ne.s32.totalorder %s107, %s110
    %p119 = scmp.eq.s32.totalorder %s15, 1
    %p120 = por %p118, %p119
    %p121 = scmp.ne.s32.totalorder %s110, %s111
    %p122 = scmp.eq.s32.totalorder %s15, 0
    %p123 = por %p121, %p122
    %p124 = scmp.ne.s32.totalorder %s110, %s111
    %p125 = scmp.eq.s32.totalorder %s16, 1
    %p126 = por %p124, %p125
    %p128 = scmp.ne.s32.totalorder %s111, %s127
    %p129 = scmp.eq.s32.totalorder %s16, 0
    %p130 = por %p128, %p129
    %p131 = scmp.le.s32.totalorder 1, %s10
    %p132 = scmp.lt.s32.totalorder %s10, 3
    %p133 = pnand %p131, %p132
    %p134 = pneg %p133
    // Predicated region
    $region9: #{conv_layer_forward.2} parent=5 // pred_check
      _
    $region10: #{conv_layer_forward.2} parent=5 // pred_check_branch
      %136 = sbr.rel (%p133) target = $region12
    $region11: #{conv_layer_forward.2} parent=5 // pred_region
      %s137 = ssub.s32 %s10, 1
      // Predicated region
      $region13: #{conv_layer_forward.2} parent=11 // pred_check
        %p138 = pneg %p71
      $region14: #{conv_layer_forward.2} parent=11 // pred_check_branch
        %140 = sbr.rel (%p138) target = $region16
      $region15: #{conv_layer_forward.2} parent=11 // pred_region
        _
      $region16: #{conv_layer_forward.2} parent=11 // pred_fallthru
        _
    $region12: #{conv_layer_forward.2} parent=5 // pred_fallthru
      _
    %p141 = scmp.lt.s32.totalorder %s10, 2
    // Predicated region
    $region17: #{conv_layer_forward.2} parent=5 // pred_check
      %p142 = pneg %p141
    $region18: #{conv_layer_forward.2} parent=5 // pred_check_branch
      %144 = sbr.rel (%p142) target = $region20
    $region19: #{conv_layer_forward.2} parent=5 // pred_region
      // Predicated region
      $region21: #{conv_layer_forward.2} parent=19 // pred_check
        %p145 = pneg %p44
      $region22: #{conv_layer_forward.2} parent=19 // pred_check_branch
        %147 = sbr.rel (%p145) target = $region24
      $region23: #{conv_layer_forward.2} parent=19 // pred_region
        %s148 = sadd.s32 %s17, %s18
        %s149 = smul.u32 4, %s148
        %p150 = scmp.lt.s32.totalorder %s149, 7
        %s151 = scalar_select %p150, %s149, 7
        %s152 = smul.addr %s151, 4
        %s153 = scalar_lea.vmem %s0, %s152
        %s154 = sadd.s32 %s17, %s18
        %s155 = smul.u32 4, %s154
      $region24: #{conv_layer_forward.2} parent=19 // pred_fallthru
        _
    $region20: #{conv_layer_forward.2} parent=5 // pred_fallthru
      _
    %p156 = scmp.le.s32.totalorder 1, %s10
    %p157 = scmp.lt.s32.totalorder %s10, 3
    %p158 = pnand %p156, %p157
    %p159 = pneg %p158
    // Predicated region
    $region25: #{conv_layer_forward.2} parent=5 // pred_check
      _
    $region26: #{conv_layer_forward.2} parent=5 // pred_check_branch
      %161 = sbr.rel (%p158) target = $region28
    $region27: #{conv_layer_forward.2} parent=5 // pred_region
      %s162 = ssub.s32 %s10, 1
      %s163 = sadd.s32 %s19, %s20
      %s164 = smul.u32 4, %s163
      %p165 = scmp.lt.s32.totalorder %s164, 7
      %s166 = scalar_select %p165, %s164, 7
      %s167 = smul.addr %s166, 4
      %s168 = scalar_lea.vmem %s0, %s167
      %p169 = pneg %p50
      %p170 = pneg %p47
      %p171 = pneg %p71
      %p172 = pneg %p68
      %p173 = pneg %p97
      %p174 = pneg %p94
      %p175 = scmp.lt.s32.totalorder %s19, 1
      %s176 = scalar_select %p175, %s19, 1
      %s177 = smul.addr %s176, 8
      %s178 = scalar_lea.vmem %s2, %s177
      %p179 = pneg %p123
      %p180 = pneg %p120
      %p181 = scmp.lt.s32.totalorder %s19, 1
      %s182 = scalar_select %p181, %s19, 1
      %s183 = smul.addr %s182, 8
      %s184 = scalar_lea.vmem %s3, %s183
      %s185 = sadd.s32 %s19, %s20
      %s186 = smul.u32 4, %s185
      %p187 = scmp.lt.s32.totalorder %s186, 7
      %s188 = scalar_select %p187, %s186, 7
      %s189 = smul.addr %s188, 4
      %s190 = scalar_lea.vmem %s0, %s189
      %s191 = sadd.s32 %s19, %s20
      %s192 = smul.u32 4, %s191
      %p193 = scmp.lt.s32.totalorder %s19, 1
      %s194 = scalar_select %p193, %s19, 1
      %s195 = smul.addr %s194, 8
      %s196 = scalar_lea.vmem %s2, %s195
      %p197 = scmp.lt.s32.totalorder %s19, 1
      %s198 = scalar_select %p197, %s19, 1
      %s199 = smul.addr %s198, 8
      %s200 = scalar_lea.vmem %s3, %s199
      %p202 = scmp.eq.s32.totalorder %s20, 0
      // Predicated region
      $region29: #{conv_layer_forward.2} parent=27 // pred_check
        %p203 = pneg %p202
      $region30: #{conv_layer_forward.2} parent=27 // pred_check_branch
        %205 = sbr.rel (%p203) target = $region32
      $region31: #{conv_layer_forward.2} parent=27 // pred_region
        %206 = vst [vmem:[%s196] sm:$0xff] 0.0
        %207 = vst [vmem:[%s200] sm:$0xff] 0.0
      $region32: #{conv_layer_forward.2} parent=27 // pred_fallthru
        _
      %v208 = vld [vmem:[%s190] sm:$0xf]
      %v209 = vld [vmem:[%s190 + $0x4] sm:$0xf]
      %v210 = vld [vmem:[%s190 + $0x8] sm:$0xf]
      %v211 = vld [vmem:[%s190 + $0xc] sm:$0xf]
      %v212 = vld [vmem:[%s1] sm:$0xf]
      %v213 = vld [vmem:[%s1 + $0x4] sm:$0xf]
      %v214 = vld [vmem:[%s1 + $0x8] sm:$0xf]
      %v215 = vld [vmem:[%s1 + $0xc] sm:$0xf]
      %v216 = vld [vmem:[%s1 + $0x10] sm:$0xf]
      %v217 = vld [vmem:[%s1 + $0x14] sm:$0xf]
      %v218 = vld [vmem:[%s1 + $0x18] sm:$0xf]
      %v219 = vld [vmem:[%s1 + $0x1c] sm:$0xf]
      %v220 = vld [vmem:[%s1 + $0x20] sm:$0xf]
      %v221 = vld [vmem:[%s1 + $0x24] sm:$0xf]
      %v222 = vld [vmem:[%s1 + $0x28] sm:$0xf]
      %v223 = vld [vmem:[%s1 + $0x2c] sm:$0xf]
      %v224 = vld [vmem:[%s1 + $0x30] sm:$0xf]
      %v225 = vld [vmem:[%s1 + $0x34] sm:$0xf]
      %v226 = vld [vmem:[%s1 + $0x38] sm:$0xf]
      %v227 = vld [vmem:[%s1 + $0x3c] sm:$0xf]
      %v232 = vunpack.c.l.b16 %v208
      %v233 = vunpack.c.l.b16 %v209
      %v234 = vunpack.c.l.b16 %v210
      %v235 = vunpack.c.l.b16 %v211
      %v236 = vpack.c.b16 %v233, %v232
      %v237 = vpack.c.b16 %v235, %v234
      %v256 = vunpack.c.l.b16 %v212
      %v257 = vunpack.c.l.b16 %v213
      %v258 = vunpack.c.l.b16 %v214
      %v259 = vunpack.c.l.b16 %v215
      %v260 = vunpack.c.l.b16 %v216
      %v261 = vunpack.c.l.b16 %v217
      %v262 = vunpack.c.l.b16 %v218
      %v263 = vunpack.c.l.b16 %v219
      %v264 = vunpack.c.l.b16 %v220
      %v265 = vunpack.c.l.b16 %v221
      %v266 = vunpack.c.l.b16 %v222
      %v267 = vunpack.c.l.b16 %v223
      %v268 = vunpack.c.l.b16 %v224
      %v269 = vunpack.c.l.b16 %v225
      %v270 = vunpack.c.l.b16 %v226
      %v271 = vunpack.c.l.b16 %v227
      %v272 = vpack.c.b16 %v257, %v256
      %v273 = vpack.c.b16 %v259, %v258
      %v274 = vpack.c.b16 %v261, %v260
      %v275 = vpack.c.b16 %v263, %v262
      %v276 = vpack.c.b16 %v265, %v264
      %v277 = vpack.c.b16 %v267, %v266
      %v278 = vpack.c.b16 %v269, %v268
      %v279 = vpack.c.b16 %v271, %v270
      %288 = vmatprep.subr.bf16.mxu0 0
      %289 = vmatpush1.bf16.msra.mxu0 %v272
      %290 = vmatprep.subr.bf16.mxu0 0
      %291 = vmatpush1.bf16.msra.mxu0 %v273
      %292 = vmatprep.subr.bf16.mxu0 0
      %293 = vmatpush1.bf16.msra.mxu0 %v274
      %294 = vmatprep.subr.bf16.mxu0 0
      %295 = vmatpush1.bf16.msra.mxu0 %v275
      %296 = vmatprep.subr.bf16.mxu0 0
      %297 = vmatpush1.bf16.msra.mxu0 %v276
      %298 = vmatprep.subr.bf16.mxu0 0
      %299 = vmatpush1.bf16.msra.mxu0 %v277
      %300 = vmatprep.subr.bf16.mxu0 0
      %301 = vmatpush1.bf16.msra.mxu0 %v278
      %302 = vmatprep.subr.bf16.mxu0 0
      %303 = vmatpush1.bf16.msra.mxu0 %v279
      %304 = vmatprep.subr.bf16.mxu0 0
      %305 = vmatpush1.bf16.msra.mxu0 0
      %306 = vmatprep.subr.bf16.mxu0 0
      %307 = vmatpush1.bf16.msra.mxu0 0
      %308 = vmatprep.subr.bf16.mxu0 0
      %309 = vmatpush1.bf16.msra.mxu0 0
      %310 = vmatprep.subr.bf16.mxu0 0
      %311 = vmatpush1.bf16.msra.mxu0 0
      %312 = vmatprep.subr.bf16.mxu0 0
      %313 = vmatpush1.bf16.msra.mxu0 0
      %314 = vmatprep.subr.bf16.mxu0 0
      %315 = vmatpush1.bf16.msra.mxu0 0
      %316 = vmatprep.subr.bf16.mxu0 0
      %317 = vmatpush1.bf16.msra.mxu0 0
      %318 = vmatprep.subr.bf16.mxu0 0
      %319 = vmatpush1.bf16.msra.mxu0 0
      %320 = vmatprep.mubr.bf16.mxu0 0
      %321 = vmatmul.mubr.bf16.gmra.mrb[0].mxu0 %v236
      %v322 = vpop.f32.mrb[0].mxu0
      %v323 = vadd.f32 0.0, %v322
      %v324 = vpop.f32.mrb[0].mxu0
      %v325 = vpop.f32.mrb[0].mxu0
      %v326 = vadd.f32 0.0, %v325
      %v327 = vpop.f32.mrb[0].mxu0
      %328 = vmatprep.mubr.bf16.mxu0 0
      %329 = vmatmul.mubr.bf16.gmra.mrb[0].mxu0 %v237
      %v330 = vpop.f32.mrb[0].mxu0
      %v331 = vadd.f32 0.0, %v330
      %v332 = vpop.f32.mrb[0].mxu0
      %v333 = vpop.f32.mrb[0].mxu0
      %v334 = vadd.f32 0.0, %v333
      %v335 = vpop.f32.mrb[0].mxu0
      %336 = vdwg.mxu0
      %s337 = scalar_lea.vmem %s1, 64
      %v338 = vld [vmem:[%s337] sm:$0xf]
      %v339 = vld [vmem:[%s337 + $0x4] sm:$0xf]
      %v340 = vld [vmem:[%s337 + $0x8] sm:$0xf]
      %v341 = vld [vmem:[%s337 + $0xc] sm:$0xf]
      %v342 = vld [vmem:[%s337 + $0x10] sm:$0xf]
      %v343 = vld [vmem:[%s337 + $0x14] sm:$0xf]
      %v344 = vld [vmem:[%s337 + $0x18] sm:$0xf]
      %v345 = vld [vmem:[%s337 + $0x1c] sm:$0xf]
      %v346 = vld [vmem:[%s337 + $0x20] sm:$0xf]
      %v347 = vld [vmem:[%s337 + $0x24] sm:$0xf]
      %v348 = vld [vmem:[%s337 + $0x28] sm:$0xf]
      %v349 = vld [vmem:[%s337 + $0x2c] sm:$0xf]
      %v350 = vld [vmem:[%s337 + $0x30] sm:$0xf]
      %v351 = vld [vmem:[%s337 + $0x34] sm:$0xf]
      %v352 = vld [vmem:[%s337 + $0x38] sm:$0xf]
      %v353 = vld [vmem:[%s337 + $0x3c] sm:$0xf]
      %s354 = scalar_lea.vmem %s1, 128
      %v355 = vld [vmem:[%s354] sm:$0xf]
      %v356 = vld [vmem:[%s354 + $0x4] sm:$0xf]
      %v357 = vld [vmem:[%s354 + $0x8] sm:$0xf]
      %v358 = vld [vmem:[%s354 + $0xc] sm:$0xf]
      %v359 = vld [vmem:[%s354 + $0x10] sm:$0xf]
      %v360 = vld [vmem:[%s354 + $0x14] sm:$0xf]
      %v361 = vld [vmem:[%s354 + $0x18] sm:$0xf]
      %v362 = vld [vmem:[%s354 + $0x1c] sm:$0xf]
      %v363 = vld [vmem:[%s354 + $0x20] sm:$0xf]
      %v364 = vld [vmem:[%s354 + $0x24] sm:$0xf]
      %v365 = vld [vmem:[%s354 + $0x28] sm:$0xf]
      %v366 = vld [vmem:[%s354 + $0x2c] sm:$0xf]
      %v367 = vld [vmem:[%s354 + $0x30] sm:$0xf]
      %v368 = vld [vmem:[%s354 + $0x34] sm:$0xf]
      %v369 = vld [vmem:[%s354 + $0x38] sm:$0xf]
      %v370 = vld [vmem:[%s354 + $0x3c] sm:$0xf]
      %v387 = vunpack.c.l.b16 %v355
      %v388 = vunpack.c.l.b16 %v356
      %v389 = vunpack.c.l.b16 %v357
      %v390 = vunpack.c.l.b16 %v358
      %v391 = vunpack.c.l.b16 %v359
      %v392 = vunpack.c.l.b16 %v360
      %v393 = vunpack.c.l.b16 %v361
      %v394 = vunpack.c.l.b16 %v362
      %v395 = vunpack.c.l.b16 %v363
      %v396 = vunpack.c.l.b16 %v364
      %v397 = vunpack.c.l.b16 %v365
      %v398 = vunpack.c.l.b16 %v366
      %v399 = vunpack.c.l.b16 %v367
      %v400 = vunpack.c.l.b16 %v368
      %v401 = vunpack.c.l.b16 %v369
      %v402 = vunpack.c.l.b16 %v370
      %v403 = vpack.c.b16 %v388, %v387
      %v404 = vpack.c.b16 %v390, %v389
      %v405 = vpack.c.b16 %v392, %v391
      %v406 = vpack.c.b16 %v394, %v393
      %v407 = vpack.c.b16 %v396, %v395
      %v408 = vpack.c.b16 %v398, %v397
      %v409 = vpack.c.b16 %v400, %v399
      %v410 = vpack.c.b16 %v402, %v401
      %419 = vmatprep.subr.bf16.mxu0 0
      %420 = vmatpush1.bf16.msra.mxu0 %v403
      %421 = vmatprep.subr.bf16.mxu0 0
      %422 = vmatpush1.bf16.msra.mxu0 %v404
      %423 = vmatprep.subr.bf16.mxu0 0
      %424 = vmatpush1.bf16.msra.mxu0 %v405
      %425 = vmatprep.subr.bf16.mxu0 0
      %426 = vmatpush1.bf16.msra.mxu0 %v406
      %427 = vmatprep.subr.bf16.mxu0 0
      %428 = vmatpush1.bf16.msra.mxu0 %v407
      %429 = vmatprep.subr.bf16.mxu0 0
      %430 = vmatpush1.bf16.msra.mxu0 %v408
      %431 = vmatprep.subr.bf16.mxu0 0
      %432 = vmatpush1.bf16.msra.mxu0 %v409
      %433 = vmatprep.subr.bf16.mxu0 0
      %434 = vmatpush1.bf16.msra.mxu0 %v410
      %435 = vmatprep.subr.bf16.mxu0 0
      %436 = vmatpush1.bf16.msra.mxu0 0
      %437 = vmatprep.subr.bf16.mxu0 0
      %438 = vmatpush1.bf16.msra.mxu0 0
      %439 = vmatprep.subr.bf16.mxu0 0
      %440 = vmatpush1.bf16.msra.mxu0 0
      %441 = vmatprep.subr.bf16.mxu0 0
      %442 = vmatpush1.bf16.msra.mxu0 0
      %443 = vmatprep.subr.bf16.mxu0 0
      %444 = vmatpush1.bf16.msra.mxu0 0
      %445 = vmatprep.subr.bf16.mxu0 0
      %446 = vmatpush1.bf16.msra.mxu0 0
      %447 = vmatprep.subr.bf16.mxu0 0
      %448 = vmatpush1.bf16.msra.mxu0 0
      %449 = vmatprep.subr.bf16.mxu0 0
      %450 = vmatpush1.bf16.msra.mxu0 0
      %451 = vmatprep.mubr.bf16.mxu0 0
      %452 = vmatmul.mubr.bf16.gmra.mrb[0].mxu0 %v236
      %v453 = vpop.f32.mrb[0].mxu0
      %v454 = vadd.f32 0.0, %v453
      %v455 = vpop.f32.mrb[0].mxu0
      %v456 = vpop.f32.mrb[0].mxu0
      %v457 = vadd.f32 0.0, %v456
      %v458 = vpop.f32.mrb[0].mxu0
      %459 = vmatprep.mubr.bf16.mxu0 0
      %460 = vmatmul.mubr.bf16.gmra.mrb[0].mxu0 %v237
      %v461 = vpop.f32.mrb[0].mxu0
      %v462 = vadd.f32 0.0, %v461
      %v463 = vpop.f32.mrb[0].mxu0
      %v464 = vpop.f32.mrb[0].mxu0
      %v465 = vadd.f32 0.0, %v464
      %v466 = vpop.f32.mrb[0].mxu0
      %467 = vdwg.mxu0
      %v468 = vlaneseq
      %v469 = vshrl.u32 %v468, 7
      %v470 = vadd.s32 %v469, 8
      %v471 = vadd.s32 %v469, 16
      %v472 = vadd.s32 %v469, 24
      %vm473 = vcmp.lt.s32.totalorder %v469, 0
      %v474 = vsub.s32 0, %v469
      %v475 = vsel %vm473, %v474, %v469
      %v476 = vshrl.u32 %v475, 4
      %v477 = vand.u32 %v475, 15
      %v478 = vsub.s32 0, %v477
      %v479 = vsel %vm473, %v478, %v477
      %vm480 = vcmp.lt.s32.totalorder %v470, 0
      %v481 = vsub.s32 0, %v470
      %v482 = vsel %vm480, %v481, %v470
      %v483 = vshrl.u32 %v482, 4
      %v484 = vand.u32 %v482, 15
      %v485 = vsub.s32 0, %v484
      %v486 = vsel %vm480, %v485, %v484
      %vm487 = vcmp.lt.s32.totalorder %v471, 0
      %v488 = vsub.s32 0, %v471
      %v489 = vsel %vm487, %v488, %v471
      %v490 = vshrl.u32 %v489, 4
      %v491 = vand.u32 %v489, 15
      %v492 = vsub.s32 0, %v491
      %v493 = vsel %vm487, %v492, %v491
      %vm494 = vcmp.lt.s32.totalorder %v472, 0
      %v495 = vsub.s32 0, %v472
      %v496 = vsel %vm494, %v495, %v472
      %v497 = vshrl.u32 %v496, 4
      %v498 = vand.u32 %v496, 15
      %v499 = vsub.s32 0, %v498
      %v500 = vsel %vm494, %v499, %v498
      %vm501 = vcmp.ne.s32.totalorder %v479, 0
      %vm502 = vcmp.ne.s32.totalorder %v486, 0
      %vm503 = vcmp.ne.s32.totalorder %v493, 0
      %vm504 = vcmp.ne.s32.totalorder %v500, 0
      %vm505 = vcmp.lt.s32.totalorder %v479, 0
      %vm506 = vcmp.lt.s32.totalorder %v486, 0
      %vm507 = vcmp.lt.s32.totalorder %v493, 0
      %vm508 = vcmp.lt.s32.totalorder %v500, 0
      %vm509 = vmand %vm505, %vm501
      %vm510 = vmand %vm506, %vm502
      %vm511 = vmand %vm507, %vm503
      %vm512 = vmand %vm508, %vm504
      %v513 = vadd.s32 %v479, 16
      %v514 = vadd.s32 %v486, 16
      %v515 = vadd.s32 %v493, 16
      %v516 = vadd.s32 %v500, 16
      %v517 = vsel %vm509, %v513, %v479
      %v518 = vsel %vm510, %v514, %v486
      %v519 = vsel %vm511, %v515, %v493
      %v520 = vsel %vm512, %v516, %v500
      %vm521 = vcmp.eq.s32.totalorder %v517, 0
      %vm522 = vcmp.eq.s32.totalorder %v518, 0
      %vm523 = vcmp.eq.s32.totalorder %v519, 0
      %vm524 = vcmp.eq.s32.totalorder %v520, 0
      %v525 = vrot.slane %v323, 7
      %v526 = vrot.slane %v326, 7
      %v527 = vrot.slane %v331, 7
      %v528 = vrot.slane %v334, 7
      %vm529 = vcmp.lt.s32.totalorder %v469, 1
      %v530 = vsel %vm529, %v527, %v528
      %v531 = vsel %vm529, %v526, %v527
      %v532 = vsel %vm529, %v525, %v526
      %v533 = vsel %vm529, %v528, %v525
      %v534 = vsel %vm521, 1, 0
      %v535 = vsel %vm522, 1, 0
      %v536 = vsel %vm523, 1, 0
      %v537 = vsel %vm524, 1, 0
      %vm538 = vcmp.eq.s32.totalorder %v534, 1
      %vm539 = vcmp.eq.s32.totalorder %v535, 1
      %vm540 = vcmp.eq.s32.totalorder %v536, 1
      %vm541 = vcmp.eq.s32.totalorder %v537, 1
      %v542 = vsel %vm538, %v531, %v533
      %v543 = vsel %vm539, %v530, %v532
      %v544 = vsel %vm540, %v533, %v531
      %v545 = vsel %vm541, %v532, %v530
      %vm546 = vcmp.eq.s32.totalorder %v517, 15
      %vm547 = vcmp.eq.s32.totalorder %v518, 15
      %vm548 = vcmp.eq.s32.totalorder %v519, 15
      %vm549 = vcmp.eq.s32.totalorder %v520, 15
      %v550 = vrot.slane %v454, 1
      %v551 = vrot.slane %v457, 1
      %v552 = vrot.slane %v462, 1
      %v553 = vrot.slane %v465, 1
      %vm554 = vcmp.lt.s32.totalorder %v469, 7
      %v555 = vsel %vm554, %v552, %v553
      %v556 = vsel %vm554, %v551, %v552
      %v557 = vsel %vm554, %v550, %v551
      %v558 = vsel %vm554, %v553, %v550
      %v559 = vsel %vm546, 1, 0
      %v560 = vsel %vm547, 1, 0
      %v561 = vsel %vm548, 1, 0
      %v562 = vsel %vm549, 1, 0
      %vm563 = vcmp.eq.s32.totalorder %v559, 1
      %vm564 = vcmp.eq.s32.totalorder %v560, 1
      %vm565 = vcmp.eq.s32.totalorder %v561, 1
      %vm566 = vcmp.eq.s32.totalorder %v562, 1
      %v567 = vsel %vm563, %v555, %v557
      %v568 = vsel %vm564, %v558, %v556
      %v569 = vsel %vm565, %v557, %v555
      %v570 = vsel %vm566, %v556, %v558
      %v587 = vunpack.c.l.b16 %v338
      %v588 = vunpack.c.l.b16 %v339
      %v589 = vunpack.c.l.b16 %v340
      %v590 = vunpack.c.l.b16 %v341
      %v591 = vunpack.c.l.b16 %v342
      %v592 = vunpack.c.l.b16 %v343
      %v593 = vunpack.c.l.b16 %v344
      %v594 = vunpack.c.l.b16 %v345
      %v595 = vunpack.c.l.b16 %v346
      %v596 = vunpack.c.l.b16 %v347
      %v597 = vunpack.c.l.b16 %v348
      %v598 = vunpack.c.l.b16 %v349
      %v599 = vunpack.c.l.b16 %v350
      %v600 = vunpack.c.l.b16 %v351
      %v601 = vunpack.c.l.b16 %v352
      %v602 = vunpack.c.l.b16 %v353
      %v603 = vpack.c.b16 %v588, %v587
      %v604 = vpack.c.b16 %v590, %v589
      %v605 = vpack.c.b16 %v592, %v591
      %v606 = vpack.c.b16 %v594, %v593
      %v607 = vpack.c.b16 %v596, %v595
      %v608 = vpack.c.b16 %v598, %v597
      %v609 = vpack.c.b16 %v600, %v599
      %v610 = vpack.c.b16 %v602, %v601
      %619 = vmatprep.subr.bf16.mxu0 0
      %620 = vmatpush1.bf16.msra.mxu0 %v603
      %621 = vmatprep.subr.bf16.mxu0 0
      %622 = vmatpush1.bf16.msra.mxu0 %v604
      %623 = vmatprep.subr.bf16.mxu0 0
      %624 = vmatpush1.bf16.msra.mxu0 %v605
      %625 = vmatprep.subr.bf16.mxu0 0
      %626 = vmatpush1.bf16.msra.mxu0 %v606
      %627 = vmatprep.subr.bf16.mxu0 0
      %628 = vmatpush1.bf16.msra.mxu0 %v607
      %629 = vmatprep.subr.bf16.mxu0 0
      %630 = vmatpush1.bf16.msra.mxu0 %v608
      %631 = vmatprep.subr.bf16.mxu0 0
      %632 = vmatpush1.bf16.msra.mxu0 %v609
      %633 = vmatprep.subr.bf16.mxu0 0
      %634 = vmatpush1.bf16.msra.mxu0 %v610
      %635 = vmatprep.subr.bf16.mxu0 0
      %636 = vmatpush1.bf16.msra.mxu0 0
      %637 = vmatprep.subr.bf16.mxu0 0
      %638 = vmatpush1.bf16.msra.mxu0 0
      %639 = vmatprep.subr.bf16.mxu0 0
      %640 = vmatpush1.bf16.msra.mxu0 0
      %641 = vmatprep.subr.bf16.mxu0 0
      %642 = vmatpush1.bf16.msra.mxu0 0
      %643 = vmatprep.subr.bf16.mxu0 0
      %644 = vmatpush1.bf16.msra.mxu0 0
      %645 = vmatprep.subr.bf16.mxu0 0
      %646 = vmatpush1.bf16.msra.mxu0 0
      %647 = vmatprep.subr.bf16.mxu0 0
      %648 = vmatpush1.bf16.msra.mxu0 0
      %649 = vmatprep.subr.bf16.mxu0 0
      %650 = vmatpush1.bf16.msra.mxu0 0
      %651 = vmatprep.mubr.bf16.mxu0 0
      %652 = vmatmul.mubr.bf16.gmra.mrb[0].mxu0 %v236
      %v653 = vpop.f32.mrb[0].mxu0
      %v654 = vadd.f32 %v542, %v653
      %v655 = vpop.f32.mrb[0].mxu0
      %v656 = vpop.f32.mrb[0].mxu0
      %v657 = vadd.f32 %v543, %v656
      %v658 = vpop.f32.mrb[0].mxu0
      %659 = vmatprep.mubr.bf16.mxu0 0
      %660 = vmatmul.mubr.bf16.gmra.mrb[0].mxu0 %v237
      %v661 = vpop.f32.mrb[0].mxu0
      %v662 = vadd.f32 %v544, %v661
      %v663 = vpop.f32.mrb[0].mxu0
      %v664 = vpop.f32.mrb[0].mxu0
      %v665 = vadd.f32 %v545, %v664
      %v666 = vpop.f32.mrb[0].mxu0
      %667 = vdwg.mxu0
      %v668 = vadd.f32 %v654, %v567
      %v669 = vadd.f32 %v657, %v568
      %v670 = vadd.f32 %v662, %v569
      %v671 = vadd.f32 %v665, %v570
      %v672 = vld [vmem:[%s196] sm:$0x1]
      %v673 = vadd.f32 %v668, %v669
      %v674 = vadd.f32 %v673, %v670
      %v675 = vadd.f32 %v674, %v671
      %v676 = vrot.slane %v675, 4
      %v677 = vadd.f32 %v675, %v676
      %v678 = vrot.slane %v677, 2
      %v679 = vadd.f32 %v677, %v678
      %v680 = vrot.slane %v679, 1
      %v681 = vadd.f32 %v679, %v680
      %v682 = vadd.f32 %v672, %v681
      %683 = vst [vmem:[%s196] sm:$0x1] %v682
      %v684 = vld [vmem:[%s200] sm:$0x1]
      %v685 = vmul.f32 %v668, %v668
      %v686 = vmul.f32 %v669, %v669
      %v687 = vmul.f32 %v670, %v670
      %v688 = vmul.f32 %v671, %v671
      %v689 = vadd.f32 %v685, %v686
      %v690 = vadd.f32 %v689, %v687
      %v691 = vadd.f32 %v690, %v688
      %v692 = vrot.slane %v691, 4
      %v693 = vadd.f32 %v691, %v692
      %v694 = vrot.slane %v693, 2
      %v695 = vadd.f32 %v693, %v694
      %v696 = vrot.slane %v695, 1
      %v697 = vadd.f32 %v695, %v696
      %v698 = vadd.f32 %v684, %v697
      %699 = vst [vmem:[%s200] sm:$0x1] %v698
      %p700 = scmp.lt.s32.totalorder %s19, 1
      %s701 = scalar_select %p700, %s19, 1
      %s702 = smul.addr %s701, 8
      %s703 = scalar_lea.vmem %s2, %s702
      %p704 = scmp.lt.s32.totalorder %s19, 1
      %s705 = scalar_select %p704, %s19, 1
      %s706 = smul.addr %s705, 8
      %s707 = scalar_lea.vmem %s3, %s706
      // Predicated region
      $region33: #{conv_layer_forward.2} parent=27 // pred_check
        %p708 = pneg %p94
      $region34: #{conv_layer_forward.2} parent=27 // pred_check_branch
        %710 = sbr.rel (%p708) target = $region36
      $region35: #{conv_layer_forward.2} parent=27 // pred_region
        _
      $region36: #{conv_layer_forward.2} parent=27 // pred_fallthru
        _
      // Predicated region
      $region37: #{conv_layer_forward.2} parent=27 // pred_check
        %p711 = pneg %p120
      $region38: #{conv_layer_forward.2} parent=27 // pred_check_branch
        %713 = sbr.rel (%p711) target = $region40
      $region39: #{conv_layer_forward.2} parent=27 // pred_region
        _
      $region40: #{conv_layer_forward.2} parent=27 // pred_fallthru
        _
    $region28: #{conv_layer_forward.2} parent=5 // pred_fallthru
      _
    %p714 = scmp.le.s32.totalorder 2, %s10
    // Predicated region
    $region41: #{conv_layer_forward.2} parent=5 // pred_check
      %p715 = pneg %p714
    $region42: #{conv_layer_forward.2} parent=5 // pred_check_branch
      %717 = sbr.rel (%p715) target = $region44
    $region43: #{conv_layer_forward.2} parent=5 // pred_region
      %s718 = ssub.s32 %s10, 2
      // Predicated region
      $region45: #{conv_layer_forward.2} parent=43 // pred_check
        %p719 = pneg %p100
      $region46: #{conv_layer_forward.2} parent=43 // pred_check_branch
        %721 = sbr.rel (%p719) target = $region48
      $region47: #{conv_layer_forward.2} parent=43 // pred_region
        %p722 = scmp.lt.s32.totalorder %s21, 1
        %s723 = scalar_select %p722, %s21, 1
        %s724 = smul.addr %s723, 8
        %s725 = scalar_lea.vmem %s2, %s724
      $region48: #{conv_layer_forward.2} parent=43 // pred_fallthru
        _
      // Predicated region
      $region49: #{conv_layer_forward.2} parent=43 // pred_check
        %p726 = pneg %p126
      $region50: #{conv_layer_forward.2} parent=43 // pred_check_branch
        %728 = sbr.rel (%p726) target = $region52
      $region51: #{conv_layer_forward.2} parent=43 // pred_region
        %p729 = scmp.lt.s32.totalorder %s21, 1
        %s730 = scalar_select %p729, %s21, 1
        %s731 = smul.addr %s730, 8
        %s732 = scalar_lea.vmem %s3, %s731
      $region52: #{conv_layer_forward.2} parent=43 // pred_fallthru
        _
    $region44: #{conv_layer_forward.2} parent=5 // pred_fallthru
      _
  $region6: #{conv_layer_forward.2} parent=0 // loop_footer
    %s14 = sadd.s32 1, %s10
  $region7: #{conv_layer_forward.2} parent=0 // loop_footer_branch
    %9 = sbr.rel target = $region3
  $region8: #{conv_layer_forward.2} parent=0 // loop_exit
    _

// kernel: conv_layer_forward.3
$region0: #{conv_layer_forward.3}
  #allocation0 [shape = 'u32[]', space=smem, size = 0x4, offset = 0x4, fixed_abs, tag = 'smem constant byte address 0x4 - core index']
  #allocation1 [shape = 'u32[144,128]{1,0:T(1,128)}', space=vmem, size = 0x12000, scoped, tag = 'internal scratch']
  #allocation2 [shape = 'f32[32,128]{1,0:T(8,128)}', space=vmem, size = 0x4000, scoped, tag = 'scratch operand']
  %s0 = inlined_call_operand.vmem [shape: bf16[64,128], index: 0, kind: input, shape index: {}]
  %s1 = inlined_call_operand.vmem [shape: bf16[3,128,128], index: 1, kind: input, shape index: {}]
  %s2 = inlined_call_operand.vmem [shape: f32[2,128], index: 2, kind: input, shape index: {}]
  %s3 = inlined_call_operand.vmem [shape: f32[16,128], index: 3, kind: output, shape index: {}]
  %s4 = sld [smem:[#allocation0]]
  $region22: #{conv_layer_forward.3} parent=0
    _
  %s6 = ssub.s32 1, %s4
  %s7 = scalar_select 0, %s6, %s4
  // Predicated region
  $region2: #{conv_layer_forward.3} parent=0 // pred_check
    _
  $region3: #{conv_layer_forward.3} parent=0 // pred_check_branch
    %9 = sbr.rel (0) target = $region5
  $region4: #{conv_layer_forward.3} parent=0 // pred_region
    _
  $region5: #{conv_layer_forward.3} parent=0 // pred_fallthru
    _
  // Predicated region
  $region6: #{conv_layer_forward.3} parent=0 // pred_check
    _
  $region7: #{conv_layer_forward.3} parent=0 // pred_check_branch
    %11 = sbr.rel (0) target = $region9
  $region8: #{conv_layer_forward.3} parent=0 // pred_region
    _
  $region9: #{conv_layer_forward.3} parent=0 // pred_fallthru
    _
  // Predicated region
  $region10: #{conv_layer_forward.3} parent=0 // pred_check
    _
  $region11: #{conv_layer_forward.3} parent=0 // pred_check_branch
    %13 = sbr.rel (0) target = $region13
  $region12: #{conv_layer_forward.3} parent=0 // pred_region
    _
  $region13: #{conv_layer_forward.3} parent=0 // pred_fallthru
    _
  %v15 = vld [vmem:[%s0] sm:$0xf]
  %v16 = vld [vmem:[%s0 + $0x4] sm:$0xf]
  %v17 = vld [vmem:[%s0 + $0x8] sm:$0xf]
  %v18 = vld [vmem:[%s0 + $0xc] sm:$0xf]
  %v19 = vld [vmem:[%s1] sm:$0xf]
  %v20 = vld [vmem:[%s1 + $0x4] sm:$0xf]
  %v21 = vld [vmem:[%s1 + $0x8] sm:$0xf]
  %v22 = vld [vmem:[%s1 + $0xc] sm:$0xf]
  %v23 = vld [vmem:[%s1 + $0x10] sm:$0xf]
  %v24 = vld [vmem:[%s1 + $0x14] sm:$0xf]
  %v25 = vld [vmem:[%s1 + $0x18] sm:$0xf]
  %v26 = vld [vmem:[%s1 + $0x1c] sm:$0xf]
  %v27 = vld [vmem:[%s1 + $0x20] sm:$0xf]
  %v28 = vld [vmem:[%s1 + $0x24] sm:$0xf]
  %v29 = vld [vmem:[%s1 + $0x28] sm:$0xf]
  %v30 = vld [vmem:[%s1 + $0x2c] sm:$0xf]
  %v31 = vld [vmem:[%s1 + $0x30] sm:$0xf]
  %v32 = vld [vmem:[%s1 + $0x34] sm:$0xf]
  %v33 = vld [vmem:[%s1 + $0x38] sm:$0xf]
  %v34 = vld [vmem:[%s1 + $0x3c] sm:$0xf]
  %v39 = vunpack.c.l.b16 %v15
  %v40 = vunpack.c.l.b16 %v16
  %v41 = vunpack.c.l.b16 %v17
  %v42 = vunpack.c.l.b16 %v18
  %v43 = vpack.c.b16 %v40, %v39
  %v44 = vpack.c.b16 %v42, %v41
  %v63 = vunpack.c.l.b16 %v19
  %v64 = vunpack.c.l.b16 %v20
  %v65 = vunpack.c.l.b16 %v21
  %v66 = vunpack.c.l.b16 %v22
  %v67 = vunpack.c.l.b16 %v23
  %v68 = vunpack.c.l.b16 %v24
  %v69 = vunpack.c.l.b16 %v25
  %v70 = vunpack.c.l.b16 %v26
  %v71 = vunpack.c.l.b16 %v27
  %v72 = vunpack.c.l.b16 %v28
  %v73 = vunpack.c.l.b16 %v29
  %v74 = vunpack.c.l.b16 %v30
  %v75 = vunpack.c.l.b16 %v31
  %v76 = vunpack.c.l.b16 %v32
  %v77 = vunpack.c.l.b16 %v33
  %v78 = vunpack.c.l.b16 %v34
  %v79 = vpack.c.b16 %v64, %v63
  %v80 = vpack.c.b16 %v66, %v65
  %v81 = vpack.c.b16 %v68, %v67
  %v82 = vpack.c.b16 %v70, %v69
  %v83 = vpack.c.b16 %v72, %v71
  %v84 = vpack.c.b16 %v74, %v73
  %v85 = vpack.c.b16 %v76, %v75
  %v86 = vpack.c.b16 %v78, %v77
  %95 = vmatprep.subr.bf16.mxu0 0
  %96 = vmatpush1.bf16.msra.mxu0 %v79
  %97 = vmatprep.subr.bf16.mxu0 0
  %98 = vmatpush1.bf16.msra.mxu0 %v80
  %99 = vmatprep.subr.bf16.mxu0 0
  %100 = vmatpush1.bf16.msra.mxu0 %v81
  %101 = vmatprep.subr.bf16.mxu0 0
  %102 = vmatpush1.bf16.msra.mxu0 %v82
  %103 = vmatprep.subr.bf16.mxu0 0
  %104 = vmatpush1.bf16.msra.mxu0 %v83
  %105 = vmatprep.subr.bf16.mxu0 0
  %106 = vmatpush1.bf16.msra.mxu0 %v84
  %107 = vmatprep.subr.bf16.mxu0 0
  %108 = vmatpush1.bf16.msra.mxu0 %v85
  %109 = vmatprep.subr.bf16.mxu0 0
  %110 = vmatpush1.bf16.msra.mxu0 %v86
  %111 = vmatprep.subr.bf16.mxu0 0
  %112 = vmatpush1.bf16.msra.mxu0 0
  %113 = vmatprep.subr.bf16.mxu0 0
  %114 = vmatpush1.bf16.msra.mxu0 0
  %115 = vmatprep.subr.bf16.mxu0 0
  %116 = vmatpush1.bf16.msra.mxu0 0
  %117 = vmatprep.subr.bf16.mxu0 0
  %118 = vmatpush1.bf16.msra.mxu0 0
  %119 = vmatprep.subr.bf16.mxu0 0
  %120 = vmatpush1.bf16.msra.mxu0 0
  %121 = vmatprep.subr.bf16.mxu0 0
  %122 = vmatpush1.bf16.msra.mxu0 0
  %123 = vmatprep.subr.bf16.mxu0 0
  %124 = vmatpush1.bf16.msra.mxu0 0
  %125 = vmatprep.subr.bf16.mxu0 0
  %126 = vmatpush1.bf16.msra.mxu0 0
  %127 = vmatprep.mubr.bf16.mxu0 0
  %128 = vmatmul.mubr.bf16.gmra.mrb[0].mxu0 %v43
  %v129 = vpop.f32.mrb[0].mxu0
  %v130 = vadd.f32 0.0, %v129
  %v131 = vpop.f32.mrb[0].mxu0
  %v132 = vpop.f32.mrb[0].mxu0
  %v133 = vadd.f32 0.0, %v132
  %v134 = vpop.f32.mrb[0].mxu0
  %135 = vmatprep.mubr.bf16.mxu0 0
  %136 = vmatmul.mubr.bf16.gmra.mrb[0].mxu0 %v44
  %v137 = vpop.f32.mrb[0].mxu0
  %v138 = vadd.f32 0.0, %v137
  %v139 = vpop.f32.mrb[0].mxu0
  %v140 = vpop.f32.mrb[0].mxu0
  %v141 = vadd.f32 0.0, %v140
  %v142 = vpop.f32.mrb[0].mxu0
  %143 = vdwg.mxu0
  %s144 = scalar_lea.vmem %s1, 64
  %v145 = vld [vmem:[%s144] sm:$0xf]
  %v146 = vld [vmem:[%s144 + $0x4] sm:$0xf]
  %v147 = vld [vmem:[%s144 + $0x8] sm:$0xf]
  %v148 = vld [vmem:[%s144 + $0xc] sm:$0xf]
  %v149 = vld [vmem:[%s144 + $0x10] sm:$0xf]
  %v150 = vld [vmem:[%s144 + $0x14] sm:$0xf]
  %v151 = vld [vmem:[%s144 + $0x18] sm:$0xf]
  %v152 = vld [vmem:[%s144 + $0x1c] sm:$0xf]
  %v153 = vld [vmem:[%s144 + $0x20] sm:$0xf]
  %v154 = vld [vmem:[%s144 + $0x24] sm:$0xf]
  %v155 = vld [vmem:[%s144 + $0x28] sm:$0xf]
  %v156 = vld [vmem:[%s144 + $0x2c] sm:$0xf]
  %v157 = vld [vmem:[%s144 + $0x30] sm:$0xf]
  %v158 = vld [vmem:[%s144 + $0x34] sm:$0xf]
  %v159 = vld [vmem:[%s144 + $0x38] sm:$0xf]
  %v160 = vld [vmem:[%s144 + $0x3c] sm:$0xf]
  %s161 = scalar_lea.vmem %s1, 128
  %v162 = vld [vmem:[%s161] sm:$0xf]
  %v163 = vld [vmem:[%s161 + $0x4] sm:$0xf]
  %v164 = vld [vmem:[%s161 + $0x8] sm:$0xf]
  %v165 = vld [vmem:[%s161 + $0xc] sm:$0xf]
  %v166 = vld [vmem:[%s161 + $0x10] sm:$0xf]
  %v167 = vld [vmem:[%s161 + $0x14] sm:$0xf]
  %v168 = vld [vmem:[%s161 + $0x18] sm:$0xf]
  %v169 = vld [vmem:[%s161 + $0x1c] sm:$0xf]
  %v170 = vld [vmem:[%s161 + $0x20] sm:$0xf]
  %v171 = vld [vmem:[%s161 + $0x24] sm:$0xf]
  %v172 = vld [vmem:[%s161 + $0x28] sm:$0xf]
  %v173 = vld [vmem:[%s161 + $0x2c] sm:$0xf]
  %v174 = vld [vmem:[%s161 + $0x30] sm:$0xf]
  %v175 = vld [vmem:[%s161 + $0x34] sm:$0xf]
  %v176 = vld [vmem:[%s161 + $0x38] sm:$0xf]
  %v177 = vld [vmem:[%s161 + $0x3c] sm:$0xf]
  %v194 = vunpack.c.l.b16 %v162
  %v195 = vunpack.c.l.b16 %v163
  %v196 = vunpack.c.l.b16 %v164
  %v197 = vunpack.c.l.b16 %v165
  %v198 = vunpack.c.l.b16 %v166
  %v199 = vunpack.c.l.b16 %v167
  %v200 = vunpack.c.l.b16 %v168
  %v201 = vunpack.c.l.b16 %v169
  %v202 = vunpack.c.l.b16 %v170
  %v203 = vunpack.c.l.b16 %v171
  %v204 = vunpack.c.l.b16 %v172
  %v205 = vunpack.c.l.b16 %v173
  %v206 = vunpack.c.l.b16 %v174
  %v207 = vunpack.c.l.b16 %v175
  %v208 = vunpack.c.l.b16 %v176
  %v209 = vunpack.c.l.b16 %v177
  %v210 = vpack.c.b16 %v195, %v194
  %v211 = vpack.c.b16 %v197, %v196
  %v212 = vpack.c.b16 %v199, %v198
  %v213 = vpack.c.b16 %v201, %v200
  %v214 = vpack.c.b16 %v203, %v202
  %v215 = vpack.c.b16 %v205, %v204
  %v216 = vpack.c.b16 %v207, %v206
  %v217 = vpack.c.b16 %v209, %v208
  %226 = vmatprep.subr.bf16.mxu0 0
  %227 = vmatpush1.bf16.msra.mxu0 %v210
  %228 = vmatprep.subr.bf16.mxu0 0
  %229 = vmatpush1.bf16.msra.mxu0 %v211
  %230 = vmatprep.subr.bf16.mxu0 0
  %231 = vmatpush1.bf16.msra.mxu0 %v212
  %232 = vmatprep.subr.bf16.mxu0 0
  %233 = vmatpush1.bf16.msra.mxu0 %v213
  %234 = vmatprep.subr.bf16.mxu0 0
  %235 = vmatpush1.bf16.msra.mxu0 %v214
  %236 = vmatprep.subr.bf16.mxu0 0
  %237 = vmatpush1.bf16.msra.mxu0 %v215
  %238 = vmatprep.subr.bf16.mxu0 0
  %239 = vmatpush1.bf16.msra.mxu0 %v216
  %240 = vmatprep.subr.bf16.mxu0 0
  %241 = vmatpush1.bf16.msra.mxu0 %v217
  %242 = vmatprep.subr.bf16.mxu0 0
  %243 = vmatpush1.bf16.msra.mxu0 0
  %244 = vmatprep.subr.bf16.mxu0 0
  %245 = vmatpush1.bf16.msra.mxu0 0
  %246 = vmatprep.subr.bf16.mxu0 0
  %247 = vmatpush1.bf16.msra.mxu0 0
  %248 = vmatprep.subr.bf16.mxu0 0
  %249 = vmatpush1.bf16.msra.mxu0 0
  %250 = vmatprep.subr.bf16.mxu0 0
  %251 = vmatpush1.bf16.msra.mxu0 0
  %252 = vmatprep.subr.bf16.mxu0 0
  %253 = vmatpush1.bf16.msra.mxu0 0
  %254 = vmatprep.subr.bf16.mxu0 0
  %255 = vmatpush1.bf16.msra.mxu0 0
  %256 = vmatprep.subr.bf16.mxu0 0
  %257 = vmatpush1.bf16.msra.mxu0 0
  %258 = vmatprep.mubr.bf16.mxu0 0
  %259 = vmatmul.mubr.bf16.gmra.mrb[0].mxu0 %v43
  %v260 = vpop.f32.mrb[0].mxu0
  %v261 = vadd.f32 0.0, %v260
  %v262 = vpop.f32.mrb[0].mxu0
  %v263 = vpop.f32.mrb[0].mxu0
  %v264 = vadd.f32 0.0, %v263
  %v265 = vpop.f32.mrb[0].mxu0
  %266 = vmatprep.mubr.bf16.mxu0 0
  %267 = vmatmul.mubr.bf16.gmra.mrb[0].mxu0 %v44
  %v268 = vpop.f32.mrb[0].mxu0
  %v269 = vadd.f32 0.0, %v268
  %v270 = vpop.f32.mrb[0].mxu0
  %v271 = vpop.f32.mrb[0].mxu0
  %v272 = vadd.f32 0.0, %v271
  %v273 = vpop.f32.mrb[0].mxu0
  %274 = vdwg.mxu0
  %v275 = vlaneseq
  %v276 = vshrl.u32 %v275, 7
  %v277 = vadd.s32 %v276, 8
  %v278 = vadd.s32 %v276, 16
  %v279 = vadd.s32 %v276, 24
  %vm280 = vcmp.lt.s32.totalorder %v276, 0
  %v281 = vsub.s32 0, %v276
  %v282 = vsel %vm280, %v281, %v276
  %v283 = vshrl.u32 %v282, 4
  %v284 = vand.u32 %v282, 15
  %v285 = vsub.s32 0, %v284
  %v286 = vsel %vm280, %v285, %v284
  %vm287 = vcmp.lt.s32.totalorder %v277, 0
  %v288 = vsub.s32 0, %v277
  %v289 = vsel %vm287, %v288, %v277
  %v290 = vshrl.u32 %v289, 4
  %v291 = vand.u32 %v289, 15
  %v292 = vsub.s32 0, %v291
  %v293 = vsel %vm287, %v292, %v291
  %vm294 = vcmp.lt.s32.totalorder %v278, 0
  %v295 = vsub.s32 0, %v278
  %v296 = vsel %vm294, %v295, %v278
  %v297 = vshrl.u32 %v296, 4
  %v298 = vand.u32 %v296, 15
  %v299 = vsub.s32 0, %v298
  %v300 = vsel %vm294, %v299, %v298
  %vm301 = vcmp.lt.s32.totalorder %v279, 0
  %v302 = vsub.s32 0, %v279
  %v303 = vsel %vm301, %v302, %v279
  %v304 = vshrl.u32 %v303, 4
  %v305 = vand.u32 %v303, 15
  %v306 = vsub.s32 0, %v305
  %v307 = vsel %vm301, %v306, %v305
  %vm308 = vcmp.ne.s32.totalorder %v286, 0
  %vm309 = vcmp.ne.s32.totalorder %v293, 0
  %vm310 = vcmp.ne.s32.totalorder %v300, 0
  %vm311 = vcmp.ne.s32.totalorder %v307, 0
  %vm312 = vcmp.lt.s32.totalorder %v286, 0
  %vm313 = vcmp.lt.s32.totalorder %v293, 0
  %vm314 = vcmp.lt.s32.totalorder %v300, 0
  %vm315 = vcmp.lt.s32.totalorder %v307, 0
  %vm316 = vmand %vm312, %vm308
  %vm317 = vmand %vm313, %vm309
  %vm318 = vmand %vm314, %vm310
  %vm319 = vmand %vm315, %vm311
  %v320 = vadd.s32 %v286, 16
  %v321 = vadd.s32 %v293, 16
  %v322 = vadd.s32 %v300, 16
  %v323 = vadd.s32 %v307, 16
  %v324 = vsel %vm316, %v320, %v286
  %v325 = vsel %vm317, %v321, %v293
  %v326 = vsel %vm318, %v322, %v300
  %v327 = vsel %vm319, %v323, %v307
  %vm328 = vcmp.eq.s32.totalorder %v324, 0
  %vm329 = vcmp.eq.s32.totalorder %v325, 0
  %vm330 = vcmp.eq.s32.totalorder %v326, 0
  %vm331 = vcmp.eq.s32.totalorder %v327, 0
  %v332 = vrot.slane %v130, 7
  %v333 = vrot.slane %v133, 7
  %v334 = vrot.slane %v138, 7
  %v335 = vrot.slane %v141, 7
  %vm336 = vcmp.lt.s32.totalorder %v276, 1
  %v337 = vsel %vm336, %v334, %v335
  %v338 = vsel %vm336, %v333, %v334
  %v339 = vsel %vm336, %v332, %v333
  %v340 = vsel %vm336, %v335, %v332
  %v341 = vsel %vm328, 1, 0
  %v342 = vsel %vm329, 1, 0
  %v343 = vsel %vm330, 1, 0
  %v344 = vsel %vm331, 1, 0
  %vm345 = vcmp.eq.s32.totalorder %v341, 1
  %vm346 = vcmp.eq.s32.totalorder %v342, 1
  %vm347 = vcmp.eq.s32.totalorder %v343, 1
  %vm348 = vcmp.eq.s32.totalorder %v344, 1
  %v349 = vsel %vm345, %v338, %v340
  %v350 = vsel %vm346, %v337, %v339
  %v351 = vsel %vm347, %v340, %v338
  %v352 = vsel %vm348, %v339, %v337
  %vm353 = vcmp.eq.s32.totalorder %v324, 15
  %vm354 = vcmp.eq.s32.totalorder %v325, 15
  %vm355 = vcmp.eq.s32.totalorder %v326, 15
  %vm356 = vcmp.eq.s32.totalorder %v327, 15
  %v357 = vrot.slane %v261, 1
  %v358 = vrot.slane %v264, 1
  %v359 = vrot.slane %v269, 1
  %v360 = vrot.slane %v272, 1
  %vm361 = vcmp.lt.s32.totalorder %v276, 7
  %v362 = vsel %vm361, %v359, %v360
  %v363 = vsel %vm361, %v358, %v359
  %v364 = vsel %vm361, %v357, %v358
  %v365 = vsel %vm361, %v360, %v357
  %v366 = vsel %vm353, 1, 0
  %v367 = vsel %vm354, 1, 0
  %v368 = vsel %vm355, 1, 0
  %v369 = vsel %vm356, 1, 0
  %vm370 = vcmp.eq.s32.totalorder %v366, 1
  %vm371 = vcmp.eq.s32.totalorder %v367, 1
  %vm372 = vcmp.eq.s32.totalorder %v368, 1
  %vm373 = vcmp.eq.s32.totalorder %v369, 1
  %v374 = vsel %vm370, %v362, %v364
  %v375 = vsel %vm371, %v365, %v363
  %v376 = vsel %vm372, %v364, %v362
  %v377 = vsel %vm373, %v363, %v365
  %v394 = vunpack.c.l.b16 %v145
  %v395 = vunpack.c.l.b16 %v146
  %v396 = vunpack.c.l.b16 %v147
  %v397 = vunpack.c.l.b16 %v148
  %v398 = vunpack.c.l.b16 %v149
  %v399 = vunpack.c.l.b16 %v150
  %v400 = vunpack.c.l.b16 %v151
  %v401 = vunpack.c.l.b16 %v152
  %v402 = vunpack.c.l.b16 %v153
  %v403 = vunpack.c.l.b16 %v154
  %v404 = vunpack.c.l.b16 %v155
  %v405 = vunpack.c.l.b16 %v156
  %v406 = vunpack.c.l.b16 %v157
  %v407 = vunpack.c.l.b16 %v158
  %v408 = vunpack.c.l.b16 %v159
  %v409 = vunpack.c.l.b16 %v160
  %v410 = vpack.c.b16 %v395, %v394
  %v411 = vpack.c.b16 %v397, %v396
  %v412 = vpack.c.b16 %v399, %v398
  %v413 = vpack.c.b16 %v401, %v400
  %v414 = vpack.c.b16 %v403, %v402
  %v415 = vpack.c.b16 %v405, %v404
  %v416 = vpack.c.b16 %v407, %v406
  %v417 = vpack.c.b16 %v409, %v408
  %426 = vmatprep.subr.bf16.mxu0 0
  %427 = vmatpush1.bf16.msra.mxu0 %v410
  %428 = vmatprep.subr.bf16.mxu0 0
  %429 = vmatpush1.bf16.msra.mxu0 %v411
  %430 = vmatprep.subr.bf16.mxu0 0
  %431 = vmatpush1.bf16.msra.mxu0 %v412
  %432 = vmatprep.subr.bf16.mxu0 0
  %433 = vmatpush1.bf16.msra.mxu0 %v413
  %434 = vmatprep.subr.bf16.mxu0 0
  %435 = vmatpush1.bf16.msra.mxu0 %v414
  %436 = vmatprep.subr.bf16.mxu0 0
  %437 = vmatpush1.bf16.msra.mxu0 %v415
  %438 = vmatprep.subr.bf16.mxu0 0
  %439 = vmatpush1.bf16.msra.mxu0 %v416
  %440 = vmatprep.subr.bf16.mxu0 0
  %441 = vmatpush1.bf16.msra.mxu0 %v417
  %442 = vmatprep.subr.bf16.mxu0 0
  %443 = vmatpush1.bf16.msra.mxu0 0
  %444 = vmatprep.subr.bf16.mxu0 0
  %445 = vmatpush1.bf16.msra.mxu0 0
  %446 = vmatprep.subr.bf16.mxu0 0
  %447 = vmatpush1.bf16.msra.mxu0 0
  %448 = vmatprep.subr.bf16.mxu0 0
  %449 = vmatpush1.bf16.msra.mxu0 0
  %450 = vmatprep.subr.bf16.mxu0 0
  %451 = vmatpush1.bf16.msra.mxu0 0
  %452 = vmatprep.subr.bf16.mxu0 0
  %453 = vmatpush1.bf16.msra.mxu0 0
  %454 = vmatprep.subr.bf16.mxu0 0
  %455 = vmatpush1.bf16.msra.mxu0 0
  %456 = vmatprep.subr.bf16.mxu0 0
  %457 = vmatpush1.bf16.msra.mxu0 0
  %458 = vmatprep.mubr.bf16.mxu0 0
  %459 = vmatmul.mubr.bf16.gmra.mrb[0].mxu0 %v43
  %v460 = vpop.f32.mrb[0].mxu0
  %v461 = vadd.f32 %v349, %v460
  %v462 = vpop.f32.mrb[0].mxu0
  %v463 = vpop.f32.mrb[0].mxu0
  %v464 = vadd.f32 %v350, %v463
  %v465 = vpop.f32.mrb[0].mxu0
  %466 = vmatprep.mubr.bf16.mxu0 0
  %467 = vmatmul.mubr.bf16.gmra.mrb[0].mxu0 %v44
  %v468 = vpop.f32.mrb[0].mxu0
  %v469 = vadd.f32 %v351, %v468
  %v470 = vpop.f32.mrb[0].mxu0
  %v471 = vpop.f32.mrb[0].mxu0
  %v472 = vadd.f32 %v352, %v471
  %v473 = vpop.f32.mrb[0].mxu0
  %474 = vdwg.mxu0
  %v475 = vadd.f32 %v461, %v374
  %v476 = vadd.f32 %v464, %v375
  %v477 = vadd.f32 %v469, %v376
  %v478 = vadd.f32 %v472, %v377
  %v479 = vld [vmem:[%s2] sm:$0x1]
  %v480 = vlaneseq
  %v481 = vshrl.u32 %v480, 7
  %v482 = vsub.s32 0, %v481
  %v483 = vrot.slane %v479, %v482
  %v484 = vmul.f32 %v475, %v483
  %v485 = vmul.f32 %v476, %v483
  %v486 = vmul.f32 %v477, %v483
  %v487 = vmul.f32 %v478, %v483
  %v488 = vld [vmem:[%s2 + $0x1] sm:$0x1]
  %v489 = vlaneseq
  %v490 = vshrl.u32 %v489, 7
  %v491 = vsub.s32 0, %v490
  %v492 = vrot.slane %v488, %v491
  %v493 = vadd.f32 %v484, %v492
  %v494 = vadd.f32 %v485, %v492
  %v495 = vadd.f32 %v486, %v492
  %v496 = vadd.f32 %v487, %v492
  %vm497 = vcmp.gt.f32.partialorder %v493, 0.0
  %vm498 = vcmp.gt.f32.partialorder %v494, 0.0
  %vm499 = vcmp.gt.f32.partialorder %v495, 0.0
  %vm500 = vcmp.gt.f32.partialorder %v496, 0.0
  %v501 = vmin.f32 %v493, 0.0
  %v502 = vmin.f32 %v494, 0.0
  %v503 = vmin.f32 %v495, 0.0
  %v504 = vmin.f32 %v496, 0.0
  %v505 = vmul.f32 %v501, 1.442695
  %v506 = vpow.pop %v505
  %v507 = vmul.f32 %v502, 1.442695
  %v508 = vpow.pop %v507
  %v509 = vmul.f32 %v503, 1.442695
  %v510 = vpow.pop %v509
  %v511 = vmul.f32 %v504, 1.442695
  %v512 = vpow.pop %v511
  %v513 = vsub.f32 %v506, 1.0
  %v514 = vsub.f32 %v508, 1.0
  %v515 = vsub.f32 %v510, 1.0
  %v516 = vsub.f32 %v512, 1.0
  %v517 = vsel %vm497, %v493, %v513
  %v518 = vsel %vm498, %v494, %v514
  %v519 = vsel %vm499, %v495, %v515
  %v520 = vsel %vm500, %v496, %v516
  %521 = vst [vmem:[#allocation2] sm:$0xff] %v517
  %522 = vst [vmem:[#allocation2 + $0x8] sm:$0xff] %v518
  %523 = vst [vmem:[#allocation2 + $0x10] sm:$0xff] %v519
  %524 = vst [vmem:[#allocation2 + $0x18] sm:$0xff] %v520
  %v525 = vld [vmem:[#allocation2] ss:$2 sm:$0xff]
  %s526 = scalar_lea.vmem [#allocation2], 16
  %v527 = vld [vmem:[%s526] ss:$2 sm:$0xff]
  %s528 = scalar_lea.vmem [#allocation2], 1
  %v529 = vld [vmem:[%s528] ss:$2 sm:$0xff]
  %s530 = scalar_lea.vmem [#allocation2], 17
  %v531 = vld [vmem:[%s530] ss:$2 sm:$0xff]
  %vm532 = vcmp.lt.s32.totalorder %v276, 0
  %v533 = vsub.s32 0, %v276
  %v534 = vsel %vm532, %v533, %v276
  %v535 = vshrl.u32 %v534, 3
  %v536 = vand.u32 %v534, 7
  %v537 = vsub.s32 0, %v536
  %v538 = vsel %vm532, %v537, %v536
  %vm539 = vcmp.lt.s32.totalorder %v277, 0
  %v540 = vsub.s32 0, %v277
  %v541 = vsel %vm539, %v540, %v277
  %v542 = vshrl.u32 %v541, 3
  %v543 = vand.u32 %v541, 7
  %v544 = vsub.s32 0, %v543
  %v545 = vsel %vm539, %v544, %v543
  %vm546 = vcmp.ne.s32.totalorder %v538, 0
  %vm547 = vcmp.ne.s32.totalorder %v545, 0
  %vm548 = vcmp.lt.s32.totalorder %v538, 0
  %vm549 = vcmp.lt.s32.totalorder %v545, 0
  %vm550 = vmand %vm548, %vm546
  %vm551 = vmand %vm549, %vm547
  %v552 = vadd.s32 %v538, 8
  %v553 = vadd.s32 %v545, 8
  %v554 = vsel %vm550, %v552, %v538
  %v555 = vsel %vm551, %v553, %v545
  %vm556 = vcmp.eq.s32.totalorder %v554, 0
  %vm557 = vcmp.eq.s32.totalorder %v555, 0
  %v558 = vrot.slane %v529, 7
  %v559 = vrot.slane %v531, 7
  %v560 = vsel %vm336, %v558, %v559
  %v561 = vsel %vm336, %v559, %v558
  %v562 = vsel %vm556, 1, 0
  %v563 = vsel %vm557, 1, 0
  %vm564 = vcmp.eq.s32.totalorder %v562, 1
  %vm565 = vcmp.eq.s32.totalorder %v563, 1
  %v566 = vsel %vm564, -1e+30, %v561
  %v567 = vsel %vm565, -1e+30, %v560
  %v568 = vmax.f32 %v566, %v525
  %v569 = vmax.f32 %v567, %v527
  %v570 = vmax.f32 %v568, %v529
  %v571 = vmax.f32 %v569, %v531
  %572 = vst [vmem:[%s3] sm:$0xff] %v570
  %573 = vst [vmem:[%s3 + $0x8] sm:$0xff] %v571
  // Predicated region
  $region14: #{conv_layer_forward.3} parent=0 // pred_check
    _
  $region15: #{conv_layer_forward.3} parent=0 // pred_check_branch
    %575 = sbr.rel (0) target = $region17
  $region16: #{conv_layer_forward.3} parent=0 // pred_region
    _
  $region17: #{conv_layer_forward.3} parent=0 // pred_fallthru
    _
  // Predicated region
  $region18: #{conv_layer_forward.3} parent=0 // pred_check
    _
  $region19: #{conv_layer_forward.3} parent=0 // pred_check_branch
    %577 = sbr.rel (0) target = $region21
  $region20: #{conv_layer_forward.3} parent=0 // pred_region
    _
  $region21: #{conv_layer_forward.3} parent=0 // pred_fallthru
    _

</llo_original>
